<compile_context>
chip_gen: v7x
topology: tpu7x:2x2x1
jax: 0.10.0
libtpu: 0.0.40
codegen_flags: <defaults>
</compile_context>

<pallas_src>
import functools
import math

import jax
import jax.numpy as jnp
from jax.experimental import pallas as pl
from jax.experimental.pallas import tpu as pltpu


_LN_EPS = 1e-5


# ---------------------------------------------------------------------------
# In-kernel helpers (f32 elementwise math)
# ---------------------------------------------------------------------------
def _layer_norm(v, gamma, beta, eps=_LN_EPS):
    mu = jnp.mean(v, axis=-1, keepdims=True)
    var = jnp.mean((v - mu) ** 2, axis=-1, keepdims=True)
    return (v - mu) * jax.lax.rsqrt(var + eps) * gamma + beta


def _gelu_tanh(x):
    c = math.sqrt(2.0 / math.pi)
    return 0.5 * x * (1.0 + jnp.tanh(c * (x + 0.044715 * x * x * x)))


def _round_up(x, m):
    return (x + m - 1) // m * m


def _const_spec(shape):
    """Grid-invariant weight/bias input: constant index map, single-buffered."""
    zeros = tuple(0 for _ in shape)
    return pl.BlockSpec(shape, lambda *_: zeros, pipeline_mode=pl.Buffered(1))


def _vmem_limit_bytes(estimate_bytes):
    """Explicit scoped-VMEM request: estimate * headroom, capped below physical."""
    try:
        phys = pltpu.get_tpu_info().vmem_capacity_bytes
    except Exception:  # noqa: BLE001 - fall back to the smallest gen (v7x)
        phys = 64 << 20
    cap = int(phys * 0.8)
    want = max(int(estimate_bytes * 1.5), 32 << 20)
    return int(min(want, cap))


def _choose_heads_per_group(n_heads, head_dim, seq_len, score_budget_bytes=8 << 20):
    """Largest head-group whose (Hg,S,S) f32 score tile fits the budget.

    Groups other than 'all heads' must keep ctx / wqkv blocks lane-aligned
    ((Hg*hd) % 128 == 0) so stores stay unmasked and BlockSpecs are legal.
    """
    cands = [h for h in range(n_heads, 0, -1)
             if n_heads % h == 0 and (h == n_heads or (h * head_dim) % 128 == 0)]
    for h in cands:
        if h * seq_len * seq_len * 4 <= score_budget_bytes:
            return h
    return cands[-1]


def _choose_ff_tile(d_ff, target=2048):
    if d_ff <= target:
        return d_ff
    t = (min(target, d_ff) // 128) * 128
    while t >= 128:
        if d_ff % t == 0:
            return t
        t -= 128
    return d_ff  # TODO(synk): pad d_ff for sizes with no 128-aligned divisor


# ---------------------------------------------------------------------------
# Kernel 1: per-head attention context for one (batch, head-group) step.
#   ctx[b, :, g*gd:(g+1)*gd] = softmax(LN1(x) Wq_g (LN1(x) Wk_g)^T / sqrt(hd)) LN1(x) Wv_g
# ---------------------------------------------------------------------------
def attention_ctx_kernel(x_ref, ln1g_ref, ln1b_ref, wqkv_ref, bqkv_ref, ctx_ref,
                         *, heads_per_group: int, head_dim: int):
    Hg, hd = heads_per_group, head_dim
    gd = Hg * hd

    x = x_ref[0].astype(jnp.float32)                  # (S, D)
    S = x.shape[0]
    scale = 1.0 / math.sqrt(hd)

    h = _layer_norm(x, ln1g_ref[...], ln1b_ref[...])  # (S, D) f32

    # Fused grouped QKV projection: one lane-dense (S, 3*gd) matmul.
    qkv = jnp.dot(h.astype(jnp.bfloat16), wqkv_ref[...],
                  preferred_element_type=jnp.float32) + bqkv_ref[...]
    # bf16 BEFORE the relayouts (halves cross-lane/copy traffic).
    q = (qkv[:, :gd] * scale).astype(jnp.bfloat16)    # fold 1/sqrt(hd) into q
    k = qkv[:, gd:2 * gd].astype(jnp.bfloat16)
    v = qkv[:, 2 * gd:].astype(jnp.bfloat16)

    qh = jnp.transpose(q.reshape(S, Hg, hd), (1, 0, 2))
    kh = jnp.transpose(k.reshape(S, Hg, hd), (1, 0, 2))
    vh = jnp.transpose(v.reshape(S, Hg, hd), (1, 0, 2))

    s = jnp.einsum("hqd,hkd->hqk", qh, kh,
                   preferred_element_type=jnp.float32)          # (Hg, S, S) f32
    s = s - jnp.max(s, axis=-1, keepdims=True)
    p = jnp.exp(s)
    p = p * pl.reciprocal(jnp.sum(p, axis=-1, keepdims=True), approx=True)  # EUP

    o = jnp.einsum("hqk,hkd->hqd", p.astype(jnp.bfloat16), vh,
                   preferred_element_type=jnp.float32)          # (Hg, S, hd)
    o = jnp.transpose(o.astype(jnp.bfloat16), (1, 0, 2)).reshape(S, gd)
    ctx_ref[0] = o                                              # bf16 ctx slab


def attention_ctx_call(x, pk, n_heads, heads_per_group):
    B, S, D = x.shape
    hd = D // n_heads
    gd = heads_per_group * hd
    G = n_heads // heads_per_group

    est = (2 * S * D * 4                      # x block (double-buffered)
           + 2 * (D * 3 * gd * 2 + 3 * gd * 4)  # grouped wqkv / bqkv
           + 2 * S * gd * 2                   # ctx out (double-buffered, bf16)
           + S * D * 4 + S * 3 * gd * 4       # LN / qkv intermediates
           + 3 * heads_per_group * S * S * 4  # scores / probs
           + 8 * S * gd * 2)                  # q/k/v (+ relayout copies)

    kernel = functools.partial(attention_ctx_kernel,
                               heads_per_group=heads_per_group, head_dim=hd)
    return pl.pallas_call(
        kernel,
        out_shape=jax.ShapeDtypeStruct((B, S, D), jnp.bfloat16),
        grid=(B, G),
        in_specs=[
            pl.BlockSpec((1, S, D), lambda b, g: (b, 0, 0)),    # x
            _const_spec((1, D)),                                # ln1 gamma
            _const_spec((1, D)),                                # ln1 beta
            pl.BlockSpec((D, 3 * gd), lambda b, g: (0, g)),     # grouped wqkv
            pl.BlockSpec((1, 3 * gd), lambda b, g: (0, g)),     # grouped bqkv
        ],
        out_specs=pl.BlockSpec((1, S, gd), lambda b, g: (b, 0, g)),
        compiler_params=pltpu.CompilerParams(
            dimension_semantics=("parallel", "parallel"),
            vmem_limit_bytes=_vmem_limit_bytes(est)),
    )(x, pk["ln1_g"], pk["ln1_b"], pk["wqkv"], pk["bqkv"])


# ---------------------------------------------------------------------------
# Kernel 2: fused  x1 = x + ctx@Wo + bo ;  out = x1 + FFN(LN2(x1))
# Grid: (row tiles of flattened B*S, d_ff tiles).  d_ff axis is a reduction
# into a (tR, D) f32 accumulator (pl.when init / finalize).
# ---------------------------------------------------------------------------
def proj_ffn_kernel(ctx_ref, x_ref, wo_ref, bo_ref, ln2g_ref, ln2b_ref,
                    w1_ref, b1_ref, w2_ref, b2_ref, out_ref,
                    x1_sc, h_sc, acc_sc):
    ff = pl.program_id(1)

    @pl.when(ff == 0)
    def _():
        x = x_ref[...].astype(jnp.float32)                       # (tR, D)
        attn = jnp.dot(ctx_ref[...], wo_ref[...],
                       preferred_element_type=jnp.float32) + bo_ref[...]
        x1 = x + attn                                            # residual 1
        x1_sc[...] = x1
        h_sc[...] = _layer_norm(x1, ln2g_ref[...], ln2b_ref[...]).astype(jnp.bfloat16)
        acc_sc[...] = jnp.zeros_like(acc_sc)

    f = jnp.dot(h_sc[...], w1_ref[...],
                preferred_element_type=jnp.float32) + b1_ref[...]  # (tR, t_ff)
    f = _gelu_tanh(f)
    acc_sc[...] += jnp.dot(f.astype(jnp.bfloat16), w2_ref[...],
                           preferred_element_type=jnp.float32)

    @pl.when(ff == pl.num_programs(1) - 1)
    def _():
        out_ref[...] = (x1_sc[...] + acc_sc[...] + b2_ref[...]).astype(out_ref.dtype)


def proj_ffn_call(ctx, x, pk, *, row_tile=256, ff_tile_target=2048):
    B, S, D = x.shape
    d_ff = pk["w1"].shape[1]
    R = B * S

    # Fixed row tile + padding (no gcd heuristic); tR is a multiple of 8.
    tR = min(row_tile, _round_up(R, 8))
    Rp = _round_up(R, tR)
    t_ff = _choose_ff_tile(d_ff, ff_tile_target)

    x2 = x.reshape(R, D)
    ctx2 = ctx.reshape(R, D)
    if Rp != R:
        pad = ((0, Rp - R), (0, 0))
        x2 = jnp.pad(x2, pad)
        ctx2 = jnp.pad(ctx2, pad)

    est = (2 * tR * D * (4 + 2)                              # x + ctx row blocks
           + D * D * 2 + 6 * D * 4                           # wo + small consts
           + 2 * (D * t_ff * 2 + t_ff * 4 + t_ff * D * 2)    # w1 / b1 / w2 tiles
           + 2 * tR * D * 4                                  # output block
           + tR * D * 10                                     # scratches
           + 2 * tR * t_ff * 4)                              # FFN intermediate

    out = pl.pallas_call(
        proj_ffn_kernel,
        out_shape=jax.ShapeDtypeStruct((Rp, D), x.dtype),
        grid=(Rp // tR, d_ff // t_ff),
        in_specs=[
            pl.BlockSpec((tR, D), lambda i, j: (i, 0)),      # ctx rows (bf16)
            pl.BlockSpec((tR, D), lambda i, j: (i, 0)),      # x rows (f32)
            _const_spec((D, D)),                             # wo
            _const_spec((1, D)),                             # bo
            _const_spec((1, D)),                             # ln2 gamma
            _const_spec((1, D)),                             # ln2 beta
            pl.BlockSpec((D, t_ff), lambda i, j: (0, j)),    # w1 tile
            pl.BlockSpec((1, t_ff), lambda i, j: (0, j)),    # b1 tile
            pl.BlockSpec((t_ff, D), lambda i, j: (j, 0)),    # w2 tile
            _const_spec((1, D)),                             # b2
        ],
        out_specs=pl.BlockSpec((tR, D), lambda i, j: (i, 0)),
        scratch_shapes=[
            pltpu.VMEM((tR, D), jnp.float32),    # x1 (post-attention residual)
            pltpu.VMEM((tR, D), jnp.bfloat16),   # LN2(x1), ready for MXU
            pltpu.VMEM((tR, D), jnp.float32),    # FFN accumulator
        ],
        compiler_params=pltpu.CompilerParams(
            dimension_semantics=("parallel", "arbitrary"),
            vmem_limit_bytes=_vmem_limit_bytes(est)),
    )(ctx2, x2, pk["wo"], pk["bo"], pk["ln2_g"], pk["ln2_b"],
      pk["w1"], pk["b1"], pk["w2"], pk["b2"])
    return out[:R].reshape(B, S, D)


# ---------------------------------------------------------------------------
# Parameter packing / layer / encoder wrappers
# ---------------------------------------------------------------------------
def pack_layer_params(p, n_heads, heads_per_group):
    """Group-major fused QKV weights; matmul weights cast to bf16 (MXU operands)."""
    D = p["wq"].shape[0]
    hd = D // n_heads
    G = n_heads // heads_per_group
    gd = heads_per_group * hd
    bf16 = jnp.bfloat16

    def gw(w):   # (D, D) -> (D, G, gd)
        return w.reshape(D, G, gd)

    def gb(b):   # (1, D) -> (1, G, gd)
        return b.reshape(1, G, gd)

    wqkv = jnp.concatenate([gw(p["wq"]), gw(p["wk"]), gw(p["wv"])],
                           axis=2).reshape(D, 3 * D).astype(bf16)
    bqkv = jnp.concatenate([gb(p["bq"]), gb(p["bk"]), gb(p["bv"])],
                           axis=2).reshape(1, 3 * D)
    return {
        "ln1_g": p["ln1_g"], "ln1_b": p["ln1_b"],
        "wqkv": wqkv, "bqkv": bqkv,
        "wo": p["wo"].astype(bf16), "bo": p["bo"],
        "ln2_g": p["ln2_g"], "ln2_b": p["ln2_b"],
        "w1": p["w1"].astype(bf16), "b1": p["b1"],
        "w2": p["w2"].astype(bf16), "b2": p["b2"],
    }


def encoder_layer(x, pk, n_heads, heads_per_group):
    ctx = attention_ctx_call(x, pk, n_heads, heads_per_group)
    return proj_ffn_call(ctx, x, pk)


def transformer_encoder(x, layer_params, n_heads):
    # TODO(synk): prefetch next layer's weights across pallas_calls (cross-call
    # DMA future, P10) to hide weight HBM traffic at realistic sizes.
    B, S, D = x.shape
    hd = D // n_heads
    hpg = _choose_heads_per_group(n_heads, hd, S)
    for p in layer_params:
        pk = pack_layer_params(p, n_heads, hpg)
        x = encoder_layer(x, pk, n_heads, hpg)
    return x


# ---------------------------------------------------------------------------
# Pure-JAX reference (mirrors kernel math: bf16 MXU operands, f32 accumulate)
# ---------------------------------------------------------------------------
def reference_layer(x, p, n_heads):
    B, S, D = x.shape
    hd = D // n_heads
    bf16 = jnp.bfloat16

    def ln(v, g, b):
        mu = jnp.mean(v, axis=-1, keepdims=True)
        var = jnp.mean((v - mu) ** 2, axis=-1, keepdims=True)
        return (v - mu) * jax.lax.rsqrt(var + _LN_EPS) * g + b

    h = ln(x, p["ln1_g"], p["ln1_b"]).astype(bf16)
    q = jnp.einsum("bsd,de->bse", h, p["wq"].astype(bf16),
                   preferred_element_type=jnp.float32) + p["bq"]
    k = jnp.einsum("bsd,de->bse", h, p["wk"].astype(bf16),
                   preferred_element_type=jnp.float32) + p["bk"]
    v = jnp.einsum("bsd,de->bse", h, p["wv"].astype(bf16),
                   preferred_element_type=jnp.float32) + p["bv"]
    q = (q / math.sqrt(hd)).reshape(B, S, n_heads, hd).transpose(0, 2, 1, 3).astype(bf16)
    k = k.reshape(B, S, n_heads, hd).transpose(0, 2, 1, 3).astype(bf16)
    v = v.reshape(B, S, n_heads, hd).transpose(0, 2, 1, 3).astype(bf16)
    s = jnp.einsum("bhqd,bhkd->bhqk", q, k, preferred_element_type=jnp.float32)
    pa = jax.nn.softmax(s, axis=-1)
    o = jnp.einsum("bhqk,bhkd->bhqd", pa.astype(bf16), v,
                   preferred_element_type=jnp.float32)
    o = o.transpose(0, 2, 1, 3).reshape(B, S, D).astype(bf16)
    attn = jnp.einsum("bsd,de->bse", o, p["wo"].astype(bf16),
                      preferred_element_type=jnp.float32) + p["bo"]
    x = x + attn

    h2 = ln(x, p["ln2_g"], p["ln2_b"]).astype(bf16)
    f = jnp.einsum("bsd,df->bsf", h2, p["w1"].astype(bf16),
                   preferred_element_type=jnp.float32) + p["b1"]
    f = _gelu_tanh(f)
    f = jnp.einsum("bsf,fd->bsd", f.astype(bf16), p["w2"].astype(bf16),
                   preferred_element_type=jnp.float32) + p["b2"]
    return x + f


def reference_encoder(x, layer_params, n_heads):
    for p in layer_params:
        x = reference_layer(x, p, n_heads)
    return x


# ---------------------------------------------------------------------------
# Deterministic parameter construction
# ---------------------------------------------------------------------------
def init_layer_params(key, d_model, d_ff):
    ks = jax.random.split(key, 8)
    n = lambda k, shape: (jax.random.normal(k, shape, jnp.float32) * 0.02)
    return {
        "ln1_g": jnp.ones((1, d_model), jnp.float32),
        "ln1_b": jnp.zeros((1, d_model), jnp.float32),
        "wq": n(ks[0], (d_model, d_model)), "bq": jnp.zeros((1, d_model), jnp.float32),
        "wk": n(ks[1], (d_model, d_model)), "bk": jnp.zeros((1, d_model), jnp.float32),
        "wv": n(ks[2], (d_model, d_model)), "bv": jnp.zeros((1, d_model), jnp.float32),
        "wo": n(ks[3], (d_model, d_model)), "bo": jnp.zeros((1, d_model), jnp.float32),
        "ln2_g": jnp.ones((1, d_model), jnp.float32),
        "ln2_b": jnp.zeros((1, d_model), jnp.float32),
        "w1": n(ks[4], (d_model, d_ff)), "b1": n(ks[5], (1, d_ff)),
        "w2": n(ks[6], (d_ff, d_model)), "b2": n(ks[7], (1, d_model)),
    }


if __name__ == "__main__":
    B, S, D = 2, 8, 32          # batch, seq, d_model (small test shapes)
    N_LAYERS = 2
    N_HEADS = 4
    D_FF = 4 * D

    root = jax.random.PRNGKey(0)
    kx, *layer_keys = jax.random.split(root, N_LAYERS + 1)

    x = jax.random.normal(kx, (B, S, D), jnp.float32)
    layer_params = [init_layer_params(k, D, D_FF) for k in layer_keys]

    run = jax.jit(transformer_encoder, static_argnums=2)
    out = run(x, layer_params, N_HEADS)
    out = jax.block_until_ready(out)

    ref = reference_encoder(x, layer_params, N_HEADS)
    assert out.shape == (B, S, D)
    assert jnp.allclose(out, ref, atol=1e-2, rtol=1e-2), "mismatch vs JAX reference"

    print("KERNEL_OK")
</pallas_src>

<mosaic_0001>
module attributes {stable_mosaic.version = 11 : i64} {
  func.func @attention_ctx_kernel(%arg0: i32, %arg1: i32, %arg2: memref<1x8x32xf32, #tpu.memory_space<vmem>>, %arg3: memref<1x32xf32, #tpu.memory_space<vmem>>, %arg4: memref<1x32xf32, #tpu.memory_space<vmem>>, %arg5: memref<32x96xbf16, #tpu.memory_space<vmem>>, %arg6: memref<1x96xf32, #tpu.memory_space<vmem>>, %arg7: memref<1x8x32xbf16, #tpu.memory_space<vmem>>) attributes {dimension_semantics = [#tpu.dimension_semantics<parallel>, #tpu.dimension_semantics<parallel>], iteration_bounds = array<i64: 2, 1>, scalar_prefetch = 0 : i64, scratch_operands = 0 : i64, tpu.core_type = #tpu.core_type<tc>, window_params = [{transform_indices = @transform_0, window_bounds = array<i64: 1, 8, 32>}, {pipeline_mode = #tpu.pipeline_mode<synchronous>, transform_indices = @transform_1, window_bounds = array<i64: 1, 32>}, {pipeline_mode = #tpu.pipeline_mode<synchronous>, transform_indices = @transform_2, window_bounds = array<i64: 1, 32>}, {transform_indices = @transform_3, window_bounds = array<i64: 32, 96>}, {transform_indices = @transform_4, window_bounds = array<i64: 1, 96>}, {transform_indices = @transform_5, window_bounds = array<i64: 1, 8, 32>}]} {
    %c0 = arith.constant 0 : index
    %c0_0 = arith.constant 0 : index
    %c0_1 = arith.constant 0 : index
    %0 = vector.load %arg2[%c0, %c0_0, %c0_1] : memref<1x8x32xf32, #tpu.memory_space<vmem>>, vector<1x8x32xf32>
    %1 = vector.shape_cast %0 : vector<1x8x32xf32> to vector<8x32xf32>
    %c0_2 = arith.constant 0 : index
    %c0_3 = arith.constant 0 : index
    %2 = vector.load %arg3[%c0_2, %c0_3] : memref<1x32xf32, #tpu.memory_space<vmem>>, vector<1x32xf32>
    %c0_4 = arith.constant 0 : index
    %c0_5 = arith.constant 0 : index
    %3 = vector.load %arg4[%c0_4, %c0_5] : memref<1x32xf32, #tpu.memory_space<vmem>>, vector<1x32xf32>
    %cst = arith.constant dense<0.000000e+00> : vector<8xf32>
    %4 = vector.multi_reduction <add>, %1, %cst [1] : vector<8x32xf32> to vector<8xf32>
    %5 = vector.shape_cast %4 : vector<8xf32> to vector<8x1xf32>
    %cst_6 = arith.constant 3.200000e+01 : f32
    %6 = vector.broadcast %cst_6 : f32 to vector<8x1xf32>
    %7 = arith.divf %5, %6 : vector<8x1xf32>
    %8 = vector.broadcast %7 : vector<8x1xf32> to vector<8x32xf32>
    %9 = arith.subf %1, %8 : vector<8x32xf32>
    %10 = arith.mulf %9, %9 : vector<8x32xf32>
    %cst_7 = arith.constant dense<0.000000e+00> : vector<8xf32>
    %11 = vector.multi_reduction <add>, %10, %cst_7 [1] : vector<8x32xf32> to vector<8xf32>
    %12 = vector.shape_cast %11 : vector<8xf32> to vector<8x1xf32>
    %cst_8 = arith.constant 3.200000e+01 : f32
    %13 = vector.broadcast %cst_8 : f32 to vector<8x1xf32>
    %14 = arith.divf %12, %13 : vector<8x1xf32>
    %15 = vector.broadcast %7 : vector<8x1xf32> to vector<8x32xf32>
    %16 = arith.subf %1, %15 : vector<8x32xf32>
    %cst_9 = arith.constant 9.99999974E-6 : f32
    %17 = vector.broadcast %cst_9 : f32 to vector<8x1xf32>
    %18 = arith.addf %14, %17 : vector<8x1xf32>
    %19 = math.rsqrt %18 : vector<8x1xf32>
    %20 = vector.broadcast %19 : vector<8x1xf32> to vector<8x32xf32>
    %21 = arith.mulf %16, %20 : vector<8x32xf32>
    %22 = vector.broadcast %2 : vector<1x32xf32> to vector<8x32xf32>
    %23 = arith.mulf %21, %22 : vector<8x32xf32>
    %24 = vector.broadcast %3 : vector<1x32xf32> to vector<8x32xf32>
    %25 = arith.addf %23, %24 : vector<8x32xf32>
    %26 = arith.truncf %25 : vector<8x32xf32> to vector<8x32xbf16>
    %c0_10 = arith.constant 0 : index
    %c0_11 = arith.constant 0 : index
    %27 = vector.load %arg5[%c0_10, %c0_11] : memref<32x96xbf16, #tpu.memory_space<vmem>>, vector<32x96xbf16>
    %cst_12 = arith.constant dense<0.000000e+00> : vector<8x96xf32>
    %28 = tpu.matmul %26, %27, %cst_12 {dimension_numbers = #tpu.dot_dimension_numbers<[1], [0], [0], [1], [0, 0, 1, 1], [], []>} : vector<8x32xbf16>, vector<32x96xbf16>, vector<8x96xf32> -> vector<8x96xf32>
    %c0_13 = arith.constant 0 : index
    %c0_14 = arith.constant 0 : index
    %29 = vector.load %arg6[%c0_13, %c0_14] : memref<1x96xf32, #tpu.memory_space<vmem>>, vector<1x96xf32>
    %30 = vector.broadcast %29 : vector<1x96xf32> to vector<8x96xf32>
    %31 = arith.addf %28, %30 : vector<8x96xf32>
    %32 = vector.extract_strided_slice %31 {offsets = [0, 0], sizes = [8, 32], strides = [1, 1]} : vector<8x96xf32> to vector<8x32xf32>
    %cst_15 = arith.constant 0.353553385 : f32
    %33 = vector.broadcast %cst_15 : f32 to vector<8x32xf32>
    %34 = arith.mulf %32, %33 : vector<8x32xf32>
    %35 = arith.truncf %34 : vector<8x32xf32> to vector<8x32xbf16>
    %36 = vector.extract_strided_slice %31 {offsets = [0, 32], sizes = [8, 32], strides = [1, 1]} : vector<8x96xf32> to vector<8x32xf32>
    %37 = arith.truncf %36 : vector<8x32xf32> to vector<8x32xbf16>
    %38 = vector.extract_strided_slice %31 {offsets = [0, 64], sizes = [8, 32], strides = [1, 1]} : vector<8x96xf32> to vector<8x32xf32>
    %39 = arith.truncf %38 : vector<8x32xf32> to vector<8x32xbf16>
    %40 = vector.shape_cast %35 : vector<8x32xbf16> to vector<8x4x8xbf16>
    %41 = tpu.transpose %40, [1, 0, 2] : vector<8x4x8xbf16> -> vector<4x8x8xbf16>
    %42 = vector.shape_cast %37 : vector<8x32xbf16> to vector<8x4x8xbf16>
    %43 = tpu.transpose %42, [1, 0, 2] : vector<8x4x8xbf16> -> vector<4x8x8xbf16>
    %44 = vector.shape_cast %39 : vector<8x32xbf16> to vector<8x4x8xbf16>
    %45 = tpu.transpose %44, [1, 0, 2] : vector<8x4x8xbf16> -> vector<4x8x8xbf16>
    "tpu.trace_start"() <{level = 10 : i32, message = "hqd,hkd->hqk"}> : () -> ()
    %cst_16 = arith.constant dense<0.000000e+00> : vector<4x8x8xf32>
    %46 = tpu.matmul %41, %43, %cst_16 {dimension_numbers = #tpu.dot_dimension_numbers<[2], [2], [1], [1], [0, 0, 0, 1, 1, 1], [0], [0]>} : vector<4x8x8xbf16>, vector<4x8x8xbf16>, vector<4x8x8xf32> -> vector<4x8x8xf32>
    "tpu.trace_stop"() : () -> ()
    %cst_17 = arith.constant dense<0xFF800000> : vector<4x8xf32>
    %47 = vector.multi_reduction <maximumf>, %46, %cst_17 [2] : vector<4x8x8xf32> to vector<4x8xf32>
    %48 = vector.shape_cast %47 : vector<4x8xf32> to vector<4x8x1xf32>
    %49 = vector.broadcast %48 : vector<4x8x1xf32> to vector<4x8x8xf32>
    %50 = arith.subf %46, %49 : vector<4x8x8xf32>
    %51 = math.exp %50 : vector<4x8x8xf32>
    %cst_18 = arith.constant dense<0.000000e+00> : vector<4x8xf32>
    %52 = vector.multi_reduction <add>, %51, %cst_18 [2] : vector<4x8x8xf32> to vector<4x8xf32>
    %53 = vector.shape_cast %52 : vector<4x8xf32> to vector<4x8x1xf32>
    %54 = tpu.reciprocal %53 {approx = true} : vector<4x8x1xf32> -> vector<4x8x1xf32>
    %55 = vector.broadcast %54 : vector<4x8x1xf32> to vector<4x8x8xf32>
    %56 = arith.mulf %51, %55 : vector<4x8x8xf32>
    %57 = arith.truncf %56 : vector<4x8x8xf32> to vector<4x8x8xbf16>
    "tpu.trace_start"() <{level = 10 : i32, message = "hqk,hkd->hqd"}> : () -> ()
    %cst_19 = arith.constant dense<0.000000e+00> : vector<4x8x8xf32>
    %58 = tpu.matmul %57, %45, %cst_19 {dimension_numbers = #tpu.dot_dimension_numbers<[2], [1], [1], [2], [0, 0, 0, 1, 1, 2], [0], [0]>} : vector<4x8x8xbf16>, vector<4x8x8xbf16>, vector<4x8x8xf32> -> vector<4x8x8xf32>
    "tpu.trace_stop"() : () -> ()
    %59 = arith.truncf %58 : vector<4x8x8xf32> to vector<4x8x8xbf16>
    %60 = tpu.transpose %59, [1, 0, 2] : vector<4x8x8xbf16> -> vector<8x4x8xbf16>
    %61 = vector.shape_cast %60 : vector<8x4x8xbf16> to vector<8x32xbf16>
    %c0_20 = arith.constant 0 : index
    %c0_21 = arith.constant 0 : index
    %c0_22 = arith.constant 0 : index
    %62 = vector.load %arg7[%c0_20, %c0_21, %c0_22] : memref<1x8x32xbf16, #tpu.memory_space<vmem>>, vector<1x8x32xbf16>
    %63 = vector.shape_cast %62 : vector<1x8x32xbf16> to vector<8x32xbf16>
    %64 = vector.shape_cast %61 : vector<8x32xbf16> to vector<1x8x32xbf16>
    tpu.vector_store %arg7[%c0_20, %c0_21, %c0_22], %64 {strides = array<i32>} : memref<1x8x32xbf16, #tpu.memory_space<vmem>>, vector<1x8x32xbf16>,
    return
  }
  func.func @transform_0(%arg0: i32, %arg1: i32) -> (i32, i32, i32) {
    %c0_i32 = arith.constant 0 : i32
    %c0_i32_0 = arith.constant 0 : i32
    %c0_i32_1 = arith.constant 0 : i32
    return %arg0, %c0_i32, %c0_i32_0 : i32, i32, i32
  }
  func.func @transform_1(%arg0: i32, %arg1: i32) -> (i32, i32) {
    %c0_i32 = arith.constant 0 : i32
    %c0_i32_0 = arith.constant 0 : i32
    %c0_i32_1 = arith.constant 0 : i32
    return %c0_i32, %c0_i32_0 : i32, i32
  }
  func.func @transform_2(%arg0: i32, %arg1: i32) -> (i32, i32) {
    %c0_i32 = arith.constant 0 : i32
    %c0_i32_0 = arith.constant 0 : i32
    %c0_i32_1 = arith.constant 0 : i32
    return %c0_i32, %c0_i32_0 : i32, i32
  }
  func.func @transform_3(%arg0: i32, %arg1: i32) -> (i32, i32) {
    %c0_i32 = arith.constant 0 : i32
    %c0_i32_0 = arith.constant 0 : i32
    return %c0_i32, %arg1 : i32, i32
  }
  func.func @transform_4(%arg0: i32, %arg1: i32) -> (i32, i32) {
    %c0_i32 = arith.constant 0 : i32
    %c0_i32_0 = arith.constant 0 : i32
    return %c0_i32, %arg1 : i32, i32
  }
  func.func @transform_5(%arg0: i32, %arg1: i32) -> (i32, i32, i32) {
    %c0_i32 = arith.constant 0 : i32
    %c0_i32_0 = arith.constant 0 : i32
    return %arg0, %c0_i32, %arg1 : i32, i32, i32
  }
}

module attributes {stable_mosaic.version = 11 : i64} {
  func.func @proj_ffn_kernel(%arg0: i32, %arg1: i32, %arg2: memref<16x32xbf16, #tpu.memory_space<vmem>>, %arg3: memref<16x32xf32, #tpu.memory_space<vmem>>, %arg4: memref<32x32xbf16, #tpu.memory_space<vmem>>, %arg5: memref<1x32xf32, #tpu.memory_space<vmem>>, %arg6: memref<1x32xf32, #tpu.memory_space<vmem>>, %arg7: memref<1x32xf32, #tpu.memory_space<vmem>>, %arg8: memref<32x128xbf16, #tpu.memory_space<vmem>>, %arg9: memref<1x128xf32, #tpu.memory_space<vmem>>, %arg10: memref<128x32xbf16, #tpu.memory_space<vmem>>, %arg11: memref<1x32xf32, #tpu.memory_space<vmem>>, %arg12: memref<16x32xf32, #tpu.memory_space<vmem>>, %arg13: memref<16x32xf32, #tpu.memory_space<vmem>>, %arg14: memref<16x32xbf16, #tpu.memory_space<vmem>>, %arg15: memref<16x32xf32, #tpu.memory_space<vmem>>) attributes {dimension_semantics = [#tpu.dimension_semantics<parallel>, #tpu.dimension_semantics<arbitrary>], iteration_bounds = array<i64: 1, 1>, scalar_prefetch = 0 : i64, scratch_operands = 3 : i64, tpu.core_type = #tpu.core_type<tc>, window_params = [{transform_indices = @transform_0, window_bounds = array<i64: 16, 32>}, {transform_indices = @transform_1, window_bounds = array<i64: 16, 32>}, {pipeline_mode = #tpu.pipeline_mode<synchronous>, transform_indices = @transform_2, window_bounds = array<i64: 32, 32>}, {pipeline_mode = #tpu.pipeline_mode<synchronous>, transform_indices = @transform_3, window_bounds = array<i64: 1, 32>}, {pipeline_mode = #tpu.pipeline_mode<synchronous>, transform_indices = @transform_4, window_bounds = array<i64: 1, 32>}, {pipeline_mode = #tpu.pipeline_mode<synchronous>, transform_indices = @transform_5, window_bounds = array<i64: 1, 32>}, {transform_indices = @transform_6, window_bounds = array<i64: 32, 128>}, {transform_indices = @transform_7, window_bounds = array<i64: 1, 128>}, {transform_indices = @transform_8, window_bounds = array<i64: 128, 32>}, {pipeline_mode = #tpu.pipeline_mode<synchronous>, transform_indices = @transform_9, window_bounds = array<i64: 1, 32>}, {transform_indices = @transform_10, window_bounds = array<i64: 16, 32>}]} {
    %c0_i32 = arith.constant 0 : i32
    %0 = arith.cmpi eq, %arg1, %c0_i32 : i32
    %1 = arith.extui %0 : i1 to i32
    %c0_i32_0 = arith.constant 0 : i32
    %2 = arith.cmpi ne, %1, %c0_i32_0 : i32
    scf.if %2 {
      %c0_19 = arith.constant 0 : index
      %c0_20 = arith.constant 0 : index
      %31 = vector.load %arg3[%c0_19, %c0_20] : memref<16x32xf32, #tpu.memory_space<vmem>>, vector<16x32xf32>
      %c0_21 = arith.constant 0 : index
      %c0_22 = arith.constant 0 : index
      %32 = vector.load %arg2[%c0_21, %c0_22] : memref<16x32xbf16, #tpu.memory_space<vmem>>, vector<16x32xbf16>
      %c0_23 = arith.constant 0 : index
      %c0_24 = arith.constant 0 : index
      %33 = vector.load %arg4[%c0_23, %c0_24] : memref<32x32xbf16, #tpu.memory_space<vmem>>, vector<32x32xbf16>
      %cst_25 = arith.constant dense<0.000000e+00> : vector<16x32xf32>
      %34 = tpu.matmul %32, %33, %cst_25 {dimension_numbers = #tpu.dot_dimension_numbers<[1], [0], [0], [1], [0, 0, 1, 1], [], []>} : vector<16x32xbf16>, vector<32x32xbf16>, vector<16x32xf32> -> vector<16x32xf32>
      %c0_26 = arith.constant 0 : index
      %c0_27 = arith.constant 0 : index
      %35 = vector.load %arg5[%c0_26, %c0_27] : memref<1x32xf32, #tpu.memory_space<vmem>>, vector<1x32xf32>
      %36 = vector.broadcast %35 : vector<1x32xf32> to vector<16x32xf32>
      %37 = arith.addf %34, %36 : vector<16x32xf32>
      %38 = arith.addf %31, %37 : vector<16x32xf32>
      %c0_28 = arith.constant 0 : index
      %c0_29 = arith.constant 0 : index
      %39 = vector.load %arg13[%c0_28, %c0_29] : memref<16x32xf32, #tpu.memory_space<vmem>>, vector<16x32xf32>
      tpu.vector_store %arg13[%c0_28, %c0_29], %38 {strides = array<i32>} : memref<16x32xf32, #tpu.memory_space<vmem>>, vector<16x32xf32>,
      %c0_30 = arith.constant 0 : index
      %c0_31 = arith.constant 0 : index
      %40 = vector.load %arg6[%c0_30, %c0_31] : memref<1x32xf32, #tpu.memory_space<vmem>>, vector<1x32xf32>
      %c0_32 = arith.constant 0 : index
      %c0_33 = arith.constant 0 : index
      %41 = vector.load %arg7[%c0_32, %c0_33] : memref<1x32xf32, #tpu.memory_space<vmem>>, vector<1x32xf32>
      %cst_34 = arith.constant dense<0.000000e+00> : vector<16xf32>
      %42 = vector.multi_reduction <add>, %38, %cst_34 [1] : vector<16x32xf32> to vector<16xf32>
      %43 = vector.shape_cast %42 : vector<16xf32> to vector<16x1xf32>
      %cst_35 = arith.constant 3.200000e+01 : f32
      %44 = vector.broadcast %cst_35 : f32 to vector<16x1xf32>
      %45 = arith.divf %43, %44 : vector<16x1xf32>
      %46 = vector.broadcast %45 : vector<16x1xf32> to vector<16x32xf32>
      %47 = arith.subf %38, %46 : vector<16x32xf32>
      %48 = arith.mulf %47, %47 : vector<16x32xf32>
      %cst_36 = arith.constant dense<0.000000e+00> : vector<16xf32>
      %49 = vector.multi_reduction <add>, %48, %cst_36 [1] : vector<16x32xf32> to vector<16xf32>
      %50 = vector.shape_cast %49 : vector<16xf32> to vector<16x1xf32>
      %cst_37 = arith.constant 3.200000e+01 : f32
      %51 = vector.broadcast %cst_37 : f32 to vector<16x1xf32>
      %52 = arith.divf %50, %51 : vector<16x1xf32>
      %53 = vector.broadcast %45 : vector<16x1xf32> to vector<16x32xf32>
      %54 = arith.subf %38, %53 : vector<16x32xf32>
      %cst_38 = arith.constant 9.99999974E-6 : f32
      %55 = vector.broadcast %cst_38 : f32 to vector<16x1xf32>
      %56 = arith.addf %52, %55 : vector<16x1xf32>
      %57 = math.rsqrt %56 : vector<16x1xf32>
      %58 = vector.broadcast %57 : vector<16x1xf32> to vector<16x32xf32>
      %59 = arith.mulf %54, %58 : vector<16x32xf32>
      %60 = vector.broadcast %40 : vector<1x32xf32> to vector<16x32xf32>
      %61 = arith.mulf %59, %60 : vector<16x32xf32>
      %62 = vector.broadcast %41 : vector<1x32xf32> to vector<16x32xf32>
      %63 = arith.addf %61, %62 : vector<16x32xf32>
      %64 = arith.truncf %63 : vector<16x32xf32> to vector<16x32xbf16>
      %c0_39 = arith.constant 0 : index
      %c0_40 = arith.constant 0 : index
      %65 = vector.load %arg14[%c0_39, %c0_40] : memref<16x32xbf16, #tpu.memory_space<vmem>>, vector<16x32xbf16>
      tpu.vector_store %arg14[%c0_39, %c0_40], %64 {strides = array<i32>} : memref<16x32xbf16, #tpu.memory_space<vmem>>, vector<16x32xbf16>,
      %cst_41 = arith.constant 0.000000e+00 : f32
      %66 = vector.broadcast %cst_41 : f32 to vector<16x32xf32>
      %c0_42 = arith.constant 0 : index
      %c0_43 = arith.constant 0 : index
      %67 = vector.load %arg15[%c0_42, %c0_43] : memref<16x32xf32, #tpu.memory_space<vmem>>, vector<16x32xf32>
      tpu.vector_store %arg15[%c0_42, %c0_43], %66 {strides = array<i32>} : memref<16x32xf32, #tpu.memory_space<vmem>>, vector<16x32xf32>,
    } else {
    }
    %c0 = arith.constant 0 : index
    %c0_1 = arith.constant 0 : index
    %3 = vector.load %arg14[%c0, %c0_1] : memref<16x32xbf16, #tpu.memory_space<vmem>>, vector<16x32xbf16>
    %c0_2 = arith.constant 0 : index
    %c0_3 = arith.constant 0 : index
    %4 = vector.load %arg8[%c0_2, %c0_3] : memref<32x128xbf16, #tpu.memory_space<vmem>>, vector<32x128xbf16>
    %cst = arith.constant dense<0.000000e+00> : vector<16x128xf32>
    %5 = tpu.matmul %3, %4, %cst {dimension_numbers = #tpu.dot_dimension_numbers<[1], [0], [0], [1], [0, 0, 1, 1], [], []>} : vector<16x32xbf16>, vector<32x128xbf16>, vector<16x128xf32> -> vector<16x128xf32>
    %c0_4 = arith.constant 0 : index
    %c0_5 = arith.constant 0 : index
    %6 = vector.load %arg9[%c0_4, %c0_5] : memref<1x128xf32, #tpu.memory_space<vmem>>, vector<1x128xf32>
    %7 = vector.broadcast %6 : vector<1x128xf32> to vector<16x128xf32>
    %8 = arith.addf %5, %7 : vector<16x128xf32>
    %cst_6 = arith.constant 5.000000e-01 : f32
    %9 = vector.broadcast %cst_6 : f32 to vector<16x128xf32>
    %10 = arith.mulf %9, %8 : vector<16x128xf32>
    %cst_7 = arith.constant 4.471500e-02 : f32
    %11 = vector.broadcast %cst_7 : f32 to vector<16x128xf32>
    %12 = arith.mulf %11, %8 : vector<16x128xf32>
    %13 = arith.mulf %12, %8 : vector<16x128xf32>
    %14 = arith.mulf %13, %8 : vector<16x128xf32>
    %15 = arith.addf %8, %14 : vector<16x128xf32>
    %cst_8 = arith.constant 0.797884583 : f32
    %16 = vector.broadcast %cst_8 : f32 to vector<16x128xf32>
    %17 = arith.mulf %16, %15 : vector<16x128xf32>
    %18 = math.tanh %17 : vector<16x128xf32>
    %cst_9 = arith.constant 1.000000e+00 : f32
    %19 = vector.broadcast %cst_9 : f32 to vector<16x128xf32>
    %20 = arith.addf %19, %18 : vector<16x128xf32>
    %21 = arith.mulf %10, %20 : vector<16x128xf32>
    %c0_10 = arith.constant 0 : index
    %c0_11 = arith.constant 0 : index
    %22 = vector.load %arg15[%c0_10, %c0_11] : memref<16x32xf32, #tpu.memory_space<vmem>>, vector<16x32xf32>
    %23 = arith.truncf %21 : vector<16x128xf32> to vector<16x128xbf16>
    %c0_12 = arith.constant 0 : index
    %c0_13 = arith.constant 0 : index
    %24 = vector.load %arg10[%c0_12, %c0_13] : memref<128x32xbf16, #tpu.memory_space<vmem>>, vector<128x32xbf16>
    %cst_14 = arith.constant dense<0.000000e+00> : vector<16x32xf32>
    %25 = tpu.matmul %23, %24, %cst_14 {dimension_numbers = #tpu.dot_dimension_numbers<[1], [0], [0], [1], [0, 0, 1, 1], [], []>} : vector<16x128xbf16>, vector<128x32xbf16>, vector<16x32xf32> -> vector<16x32xf32>
    %26 = arith.addf %22, %25 : vector<16x32xf32>
    %c0_15 = arith.constant 0 : index
    %c0_16 = arith.constant 0 : index
    %27 = vector.load %arg15[%c0_15, %c0_16] : memref<16x32xf32, #tpu.memory_space<vmem>>, vector<16x32xf32>
    tpu.vector_store %arg15[%c0_15, %c0_16], %26 {strides = array<i32>} : memref<16x32xf32, #tpu.memory_space<vmem>>, vector<16x32xf32>,
    %c0_i32_17 = arith.constant 0 : i32
    %28 = arith.cmpi eq, %arg1, %c0_i32_17 : i32
    %29 = arith.extui %28 : i1 to i32
    %c0_i32_18 = arith.constant 0 : i32
    %30 = arith.cmpi ne, %29, %c0_i32_18 : i32
    scf.if %30 {
      %c0_19 = arith.constant 0 : index
      %c0_20 = arith.constant 0 : index
      %31 = vector.load %arg13[%c0_19, %c0_20] : memref<16x32xf32, #tpu.memory_space<vmem>>, vector<16x32xf32>
      %c0_21 = arith.constant 0 : index
      %c0_22 = arith.constant 0 : index
      %32 = vector.load %arg15[%c0_21, %c0_22] : memref<16x32xf32, #tpu.memory_space<vmem>>, vector<16x32xf32>
      %33 = arith.addf %31, %32 : vector<16x32xf32>
      %c0_23 = arith.constant 0 : index
      %c0_24 = arith.constant 0 : index
      %34 = vector.load %arg11[%c0_23, %c0_24] : memref<1x32xf32, #tpu.memory_space<vmem>>, vector<1x32xf32>
      %35 = vector.broadcast %34 : vector<1x32xf32> to vector<16x32xf32>
      %36 = arith.addf %33, %35 : vector<16x32xf32>
      %c0_25 = arith.constant 0 : index
      %c0_26 = arith.constant 0 : index
      %37 = vector.load %arg12[%c0_25, %c0_26] : memref<16x32xf32, #tpu.memory_space<vmem>>, vector<16x32xf32>
      tpu.vector_store %arg12[%c0_25, %c0_26], %36 {strides = array<i32>} : memref<16x32xf32, #tpu.memory_space<vmem>>, vector<16x32xf32>,
    } else {
    }
    return
  }
  func.func @transform_0(%arg0: i32, %arg1: i32) -> (i32, i32) {
    %c0_i32 = arith.constant 0 : i32
    %c0_i32_0 = arith.constant 0 : i32
    return %arg0, %c0_i32 : i32, i32
  }
  func.func @transform_1(%arg0: i32, %arg1: i32) -> (i32, i32) {
    %c0_i32 = arith.constant 0 : i32
    %c0_i32_0 = arith.constant 0 : i32
    return %arg0, %c0_i32 : i32, i32
  }
  func.func @transform_2(%arg0: i32, %arg1: i32) -> (i32, i32) {
    %c0_i32 = arith.constant 0 : i32
    %c0_i32_0 = arith.constant 0 : i32
    %c0_i32_1 = arith.constant 0 : i32
    return %c0_i32, %c0_i32_0 : i32, i32
  }
  func.func @transform_3(%arg0: i32, %arg1: i32) -> (i32, i32) {
    %c0_i32 = arith.constant 0 : i32
    %c0_i32_0 = arith.constant 0 : i32
    %c0_i32_1 = arith.constant 0 : i32
    return %c0_i32, %c0_i32_0 : i32, i32
  }
  func.func @transform_4(%arg0: i32, %arg1: i32) -> (i32, i32) {
    %c0_i32 = arith.constant 0 : i32
    %c0_i32_0 = arith.constant 0 : i32
    %c0_i32_1 = arith.constant 0 : i32
    return %c0_i32, %c0_i32_0 : i32, i32
  }
  func.func @transform_5(%arg0: i32, %arg1: i32) -> (i32, i32) {
    %c0_i32 = arith.constant 0 : i32
    %c0_i32_0 = arith.constant 0 : i32
    %c0_i32_1 = arith.constant 0 : i32
    return %c0_i32, %c0_i32_0 : i32, i32
  }
  func.func @transform_6(%arg0: i32, %arg1: i32) -> (i32, i32) {
    %c0_i32 = arith.constant 0 : i32
    %c0_i32_0 = arith.constant 0 : i32
    return %c0_i32, %arg1 : i32, i32
  }
  func.func @transform_7(%arg0: i32, %arg1: i32) -> (i32, i32) {
    %c0_i32 = arith.constant 0 : i32
    %c0_i32_0 = arith.constant 0 : i32
    return %c0_i32, %arg1 : i32, i32
  }
  func.func @transform_8(%arg0: i32, %arg1: i32) -> (i32, i32) {
    %c0_i32 = arith.constant 0 : i32
    %c0_i32_0 = arith.constant 0 : i32
    return %arg1, %c0_i32 : i32, i32
  }
  func.func @transform_9(%arg0: i32, %arg1: i32) -> (i32, i32) {
    %c0_i32 = arith.constant 0 : i32
    %c0_i32_0 = arith.constant 0 : i32
    %c0_i32_1 = arith.constant 0 : i32
    return %c0_i32, %c0_i32_0 : i32, i32
  }
  func.func @transform_10(%arg0: i32, %arg1: i32) -> (i32, i32) {
    %c0_i32 = arith.constant 0 : i32
    %c0_i32_0 = arith.constant 0 : i32
    return %arg0, %c0_i32 : i32, i32
  }
}

module attributes {stable_mosaic.version = 11 : i64} {
  func.func @proj_ffn_kernel(%arg0: i32, %arg1: i32, %arg2: memref<16x32xbf16, #tpu.memory_space<vmem>>, %arg3: memref<16x32xf32, #tpu.memory_space<vmem>>, %arg4: memref<32x32xbf16, #tpu.memory_space<vmem>>, %arg5: memref<1x32xf32, #tpu.memory_space<vmem>>, %arg6: memref<1x32xf32, #tpu.memory_space<vmem>>, %arg7: memref<1x32xf32, #tpu.memory_space<vmem>>, %arg8: memref<32x128xbf16, #tpu.memory_space<vmem>>, %arg9: memref<1x128xf32, #tpu.memory_space<vmem>>, %arg10: memref<128x32xbf16, #tpu.memory_space<vmem>>, %arg11: memref<1x32xf32, #tpu.memory_space<vmem>>, %arg12: memref<16x32xf32, #tpu.memory_space<vmem>>, %arg13: memref<16x32xf32, #tpu.memory_space<vmem>>, %arg14: memref<16x32xbf16, #tpu.memory_space<vmem>>, %arg15: memref<16x32xf32, #tpu.memory_space<vmem>>) attributes {dimension_semantics = [#tpu.dimension_semantics<parallel>, #tpu.dimension_semantics<arbitrary>], iteration_bounds = array<i64: 1, 1>, scalar_prefetch = 0 : i64, scratch_operands = 3 : i64, tpu.core_type = #tpu.core_type<tc>, window_params = [{transform_indices = @transform_0, window_bounds = array<i64: 16, 32>}, {transform_indices = @transform_1, window_bounds = array<i64: 16, 32>}, {pipeline_mode = #tpu.pipeline_mode<synchronous>, transform_indices = @transform_2, window_bounds = array<i64: 32, 32>}, {pipeline_mode = #tpu.pipeline_mode<synchronous>, transform_indices = @transform_3, window_bounds = array<i64: 1, 32>}, {pipeline_mode = #tpu.pipeline_mode<synchronous>, transform_indices = @transform_4, window_bounds = array<i64: 1, 32>}, {pipeline_mode = #tpu.pipeline_mode<synchronous>, transform_indices = @transform_5, window_bounds = array<i64: 1, 32>}, {transform_indices = @transform_6, window_bounds = array<i64: 32, 128>}, {transform_indices = @transform_7, window_bounds = array<i64: 1, 128>}, {transform_indices = @transform_8, window_bounds = array<i64: 128, 32>}, {pipeline_mode = #tpu.pipeline_mode<synchronous>, transform_indices = @transform_9, window_bounds = array<i64: 1, 32>}, {transform_indices = @transform_10, window_bounds = array<i64: 16, 32>}]} {
    %c0_i32 = arith.constant 0 : i32
    %0 = arith.cmpi eq, %arg1, %c0_i32 : i32
    %1 = arith.extui %0 : i1 to i32
    %c0_i32_0 = arith.constant 0 : i32
    %2 = arith.cmpi ne, %1, %c0_i32_0 : i32
    scf.if %2 {
      %c0_19 = arith.constant 0 : index
      %c0_20 = arith.constant 0 : index
      %31 = vector.load %arg3[%c0_19, %c0_20] : memref<16x32xf32, #tpu.memory_space<vmem>>, vector<16x32xf32>
      %c0_21 = arith.constant 0 : index
      %c0_22 = arith.constant 0 : index
      %32 = vector.load %arg2[%c0_21, %c0_22] : memref<16x32xbf16, #tpu.memory_space<vmem>>, vector<16x32xbf16>
      %c0_23 = arith.constant 0 : index
      %c0_24 = arith.constant 0 : index
      %33 = vector.load %arg4[%c0_23, %c0_24] : memref<32x32xbf16, #tpu.memory_space<vmem>>, vector<32x32xbf16>
      %cst_25 = arith.constant dense<0.000000e+00> : vector<16x32xf32>
      %34 = tpu.matmul %32, %33, %cst_25 {dimension_numbers = #tpu.dot_dimension_numbers<[1], [0], [0], [1], [0, 0, 1, 1], [], []>} : vector<16x32xbf16>, vector<32x32xbf16>, vector<16x32xf32> -> vector<16x32xf32>
      %c0_26 = arith.constant 0 : index
      %c0_27 = arith.constant 0 : index
      %35 = vector.load %arg5[%c0_26, %c0_27] : memref<1x32xf32, #tpu.memory_space<vmem>>, vector<1x32xf32>
      %36 = vector.broadcast %35 : vector<1x32xf32> to vector<16x32xf32>
      %37 = arith.addf %34, %36 : vector<16x32xf32>
      %38 = arith.addf %31, %37 : vector<16x32xf32>
      %c0_28 = arith.constant 0 : index
      %c0_29 = arith.constant 0 : index
      %39 = vector.load %arg13[%c0_28, %c0_29] : memref<16x32xf32, #tpu.memory_space<vmem>>, vector<16x32xf32>
      tpu.vector_store %arg13[%c0_28, %c0_29], %38 {strides = array<i32>} : memref<16x32xf32, #tpu.memory_space<vmem>>, vector<16x32xf32>,
      %c0_30 = arith.constant 0 : index
      %c0_31 = arith.constant 0 : index
      %40 = vector.load %arg6[%c0_30, %c0_31] : memref<1x32xf32, #tpu.memory_space<vmem>>, vector<1x32xf32>
      %c0_32 = arith.constant 0 : index
      %c0_33 = arith.constant 0 : index
      %41 = vector.load %arg7[%c0_32, %c0_33] : memref<1x32xf32, #tpu.memory_space<vmem>>, vector<1x32xf32>
      %cst_34 = arith.constant dense<0.000000e+00> : vector<16xf32>
      %42 = vector.multi_reduction <add>, %38, %cst_34 [1] : vector<16x32xf32> to vector<16xf32>
      %43 = vector.shape_cast %42 : vector<16xf32> to vector<16x1xf32>
      %cst_35 = arith.constant 3.200000e+01 : f32
      %44 = vector.broadcast %cst_35 : f32 to vector<16x1xf32>
      %45 = arith.divf %43, %44 : vector<16x1xf32>
      %46 = vector.broadcast %45 : vector<16x1xf32> to vector<16x32xf32>
      %47 = arith.subf %38, %46 : vector<16x32xf32>
      %48 = arith.mulf %47, %47 : vector<16x32xf32>
      %cst_36 = arith.constant dense<0.000000e+00> : vector<16xf32>
      %49 = vector.multi_reduction <add>, %48, %cst_36 [1] : vector<16x32xf32> to vector<16xf32>
      %50 = vector.shape_cast %49 : vector<16xf32> to vector<16x1xf32>
      %cst_37 = arith.constant 3.200000e+01 : f32
      %51 = vector.broadcast %cst_37 : f32 to vector<16x1xf32>
      %52 = arith.divf %50, %51 : vector<16x1xf32>
      %53 = vector.broadcast %45 : vector<16x1xf32> to vector<16x32xf32>
      %54 = arith.subf %38, %53 : vector<16x32xf32>
      %cst_38 = arith.constant 9.99999974E-6 : f32
      %55 = vector.broadcast %cst_38 : f32 to vector<16x1xf32>
      %56 = arith.addf %52, %55 : vector<16x1xf32>
      %57 = math.rsqrt %56 : vector<16x1xf32>
      %58 = vector.broadcast %57 : vector<16x1xf32> to vector<16x32xf32>
      %59 = arith.mulf %54, %58 : vector<16x32xf32>
      %60 = vector.broadcast %40 : vector<1x32xf32> to vector<16x32xf32>
      %61 = arith.mulf %59, %60 : vector<16x32xf32>
      %62 = vector.broadcast %41 : vector<1x32xf32> to vector<16x32xf32>
      %63 = arith.addf %61, %62 : vector<16x32xf32>
      %64 = arith.truncf %63 : vector<16x32xf32> to vector<16x32xbf16>
      %c0_39 = arith.constant 0 : index
      %c0_40 = arith.constant 0 : index
      %65 = vector.load %arg14[%c0_39, %c0_40] : memref<16x32xbf16, #tpu.memory_space<vmem>>, vector<16x32xbf16>
      tpu.vector_store %arg14[%c0_39, %c0_40], %64 {strides = array<i32>} : memref<16x32xbf16, #tpu.memory_space<vmem>>, vector<16x32xbf16>,
      %cst_41 = arith.constant 0.000000e+00 : f32
      %66 = vector.broadcast %cst_41 : f32 to vector<16x32xf32>
      %c0_42 = arith.constant 0 : index
      %c0_43 = arith.constant 0 : index
      %67 = vector.load %arg15[%c0_42, %c0_43] : memref<16x32xf32, #tpu.memory_space<vmem>>, vector<16x32xf32>
      tpu.vector_store %arg15[%c0_42, %c0_43], %66 {strides = array<i32>} : memref<16x32xf32, #tpu.memory_space<vmem>>, vector<16x32xf32>,
    } else {
    }
    %c0 = arith.constant 0 : index
    %c0_1 = arith.constant 0 : index
    %3 = vector.load %arg14[%c0, %c0_1] : memref<16x32xbf16, #tpu.memory_space<vmem>>, vector<16x32xbf16>
    %c0_2 = arith.constant 0 : index
    %c0_3 = arith.constant 0 : index
    %4 = vector.load %arg8[%c0_2, %c0_3] : memref<32x128xbf16, #tpu.memory_space<vmem>>, vector<32x128xbf16>
    %cst = arith.constant dense<0.000000e+00> : vector<16x128xf32>
    %5 = tpu.matmul %3, %4, %cst {dimension_numbers = #tpu.dot_dimension_numbers<[1], [0], [0], [1], [0, 0, 1, 1], [], []>} : vector<16x32xbf16>, vector<32x128xbf16>, vector<16x128xf32> -> vector<16x128xf32>
    %c0_4 = arith.constant 0 : index
    %c0_5 = arith.constant 0 : index
    %6 = vector.load %arg9[%c0_4, %c0_5] : memref<1x128xf32, #tpu.memory_space<vmem>>, vector<1x128xf32>
    %7 = vector.broadcast %6 : vector<1x128xf32> to vector<16x128xf32>
    %8 = arith.addf %5, %7 : vector<16x128xf32>
    %cst_6 = arith.constant 5.000000e-01 : f32
    %9 = vector.broadcast %cst_6 : f32 to vector<16x128xf32>
    %10 = arith.mulf %9, %8 : vector<16x128xf32>
    %cst_7 = arith.constant 4.471500e-02 : f32
    %11 = vector.broadcast %cst_7 : f32 to vector<16x128xf32>
    %12 = arith.mulf %11, %8 : vector<16x128xf32>
    %13 = arith.mulf %12, %8 : vector<16x128xf32>
    %14 = arith.mulf %13, %8 : vector<16x128xf32>
    %15 = arith.addf %8, %14 : vector<16x128xf32>
    %cst_8 = arith.constant 0.797884583 : f32
    %16 = vector.broadcast %cst_8 : f32 to vector<16x128xf32>
    %17 = arith.mulf %16, %15 : vector<16x128xf32>
    %18 = math.tanh %17 : vector<16x128xf32>
    %cst_9 = arith.constant 1.000000e+00 : f32
    %19 = vector.broadcast %cst_9 : f32 to vector<16x128xf32>
    %20 = arith.addf %19, %18 : vector<16x128xf32>
    %21 = arith.mulf %10, %20 : vector<16x128xf32>
    %c0_10 = arith.constant 0 : index
    %c0_11 = arith.constant 0 : index
    %22 = vector.load %arg15[%c0_10, %c0_11] : memref<16x32xf32, #tpu.memory_space<vmem>>, vector<16x32xf32>
    %23 = arith.truncf %21 : vector<16x128xf32> to vector<16x128xbf16>
    %c0_12 = arith.constant 0 : index
    %c0_13 = arith.constant 0 : index
    %24 = vector.load %arg10[%c0_12, %c0_13] : memref<128x32xbf16, #tpu.memory_space<vmem>>, vector<128x32xbf16>
    %cst_14 = arith.constant dense<0.000000e+00> : vector<16x32xf32>
    %25 = tpu.matmul %23, %24, %cst_14 {dimension_numbers = #tpu.dot_dimension_numbers<[1], [0], [0], [1], [0, 0, 1, 1], [], []>} : vector<16x128xbf16>, vector<128x32xbf16>, vector<16x32xf32> -> vector<16x32xf32>
    %26 = arith.addf %22, %25 : vector<16x32xf32>
    %c0_15 = arith.constant 0 : index
    %c0_16 = arith.constant 0 : index
    %27 = vector.load %arg15[%c0_15, %c0_16] : memref<16x32xf32, #tpu.memory_space<vmem>>, vector<16x32xf32>
    tpu.vector_store %arg15[%c0_15, %c0_16], %26 {strides = array<i32>} : memref<16x32xf32, #tpu.memory_space<vmem>>, vector<16x32xf32>,
    %c0_i32_17 = arith.constant 0 : i32
    %28 = arith.cmpi eq, %arg1, %c0_i32_17 : i32
    %29 = arith.extui %28 : i1 to i32
    %c0_i32_18 = arith.constant 0 : i32
    %30 = arith.cmpi ne, %29, %c0_i32_18 : i32
    scf.if %30 {
      %c0_19 = arith.constant 0 : index
      %c0_20 = arith.constant 0 : index
      %31 = vector.load %arg13[%c0_19, %c0_20] : memref<16x32xf32, #tpu.memory_space<vmem>>, vector<16x32xf32>
      %c0_21 = arith.constant 0 : index
      %c0_22 = arith.constant 0 : index
      %32 = vector.load %arg15[%c0_21, %c0_22] : memref<16x32xf32, #tpu.memory_space<vmem>>, vector<16x32xf32>
      %33 = arith.addf %31, %32 : vector<16x32xf32>
      %c0_23 = arith.constant 0 : index
      %c0_24 = arith.constant 0 : index
      %34 = vector.load %arg11[%c0_23, %c0_24] : memref<1x32xf32, #tpu.memory_space<vmem>>, vector<1x32xf32>
      %35 = vector.broadcast %34 : vector<1x32xf32> to vector<16x32xf32>
      %36 = arith.addf %33, %35 : vector<16x32xf32>
      %c0_25 = arith.constant 0 : index
      %c0_26 = arith.constant 0 : index
      %37 = vector.load %arg12[%c0_25, %c0_26] : memref<16x32xf32, #tpu.memory_space<vmem>>, vector<16x32xf32>
      tpu.vector_store %arg12[%c0_25, %c0_26], %36 {strides = array<i32>} : memref<16x32xf32, #tpu.memory_space<vmem>>, vector<16x32xf32>,
    } else {
    }
    return
  }
  func.func @transform_0(%arg0: i32, %arg1: i32) -> (i32, i32) {
    %c0_i32 = arith.constant 0 : i32
    %c0_i32_0 = arith.constant 0 : i32
    return %arg0, %c0_i32 : i32, i32
  }
  func.func @transform_1(%arg0: i32, %arg1: i32) -> (i32, i32) {
    %c0_i32 = arith.constant 0 : i32
    %c0_i32_0 = arith.constant 0 : i32
    return %arg0, %c0_i32 : i32, i32
  }
  func.func @transform_2(%arg0: i32, %arg1: i32) -> (i32, i32) {
    %c0_i32 = arith.constant 0 : i32
    %c0_i32_0 = arith.constant 0 : i32
    %c0_i32_1 = arith.constant 0 : i32
    return %c0_i32, %c0_i32_0 : i32, i32
  }
  func.func @transform_3(%arg0: i32, %arg1: i32) -> (i32, i32) {
    %c0_i32 = arith.constant 0 : i32
    %c0_i32_0 = arith.constant 0 : i32
    %c0_i32_1 = arith.constant 0 : i32
    return %c0_i32, %c0_i32_0 : i32, i32
  }
  func.func @transform_4(%arg0: i32, %arg1: i32) -> (i32, i32) {
    %c0_i32 = arith.constant 0 : i32
    %c0_i32_0 = arith.constant 0 : i32
    %c0_i32_1 = arith.constant 0 : i32
    return %c0_i32, %c0_i32_0 : i32, i32
  }
  func.func @transform_5(%arg0: i32, %arg1: i32) -> (i32, i32) {
    %c0_i32 = arith.constant 0 : i32
    %c0_i32_0 = arith.constant 0 : i32
    %c0_i32_1 = arith.constant 0 : i32
    return %c0_i32, %c0_i32_0 : i32, i32
  }
  func.func @transform_6(%arg0: i32, %arg1: i32) -> (i32, i32) {
    %c0_i32 = arith.constant 0 : i32
    %c0_i32_0 = arith.constant 0 : i32
    return %c0_i32, %arg1 : i32, i32
  }
  func.func @transform_7(%arg0: i32, %arg1: i32) -> (i32, i32) {
    %c0_i32 = arith.constant 0 : i32
    %c0_i32_0 = arith.constant 0 : i32
    return %c0_i32, %arg1 : i32, i32
  }
  func.func @transform_8(%arg0: i32, %arg1: i32) -> (i32, i32) {
    %c0_i32 = arith.constant 0 : i32
    %c0_i32_0 = arith.constant 0 : i32
    return %arg1, %c0_i32 : i32, i32
  }
  func.func @transform_9(%arg0: i32, %arg1: i32) -> (i32, i32) {
    %c0_i32 = arith.constant 0 : i32
    %c0_i32_0 = arith.constant 0 : i32
    %c0_i32_1 = arith.constant 0 : i32
    return %c0_i32, %c0_i32_0 : i32, i32
  }
  func.func @transform_10(%arg0: i32, %arg1: i32) -> (i32, i32) {
    %c0_i32 = arith.constant 0 : i32
    %c0_i32_0 = arith.constant 0 : i32
    return %arg0, %c0_i32 : i32, i32
  }
}

</mosaic_0001>

<llo_original>
// kernel: transformer_encoder.7
$region0: #{transformer_encoder.7}
  #allocation0 [shape = 'u32[]', space=smem, size = 0x4, offset = 0x4, fixed_abs, tag = 'smem constant byte address 0x4 - core index']
  #allocation1 [shape = 'u32[144,128]{1,0:T(1,128)}', space=vmem, size = 0x12000, scoped, tag = 'internal scratch']
  #allocation2 [shape = 'f32[16,32]{1,0:T(8,128)}', space=vmem, size = 0x2000, scoped, tag = 'scratch operand']
  #allocation3 [shape = 'bf16[16,32]{1,0:T(16,128)(2,1)}', space=vmem, size = 0x1000, scoped, tag = 'scratch operand']
  #allocation4 [shape = 'f32[16,32]{1,0:T(8,128)}', space=vmem, size = 0x2000, scoped, tag = 'scratch operand']
  %s0 = inlined_call_operand.vmem [shape: bf16[16,32], index: 0, kind: input, shape index: {}]
  %s1 = inlined_call_operand.vmem [shape: f32[16,32], index: 1, kind: input, shape index: {}]
  %s2 = inlined_call_operand.vmem [shape: bf16[32,32], index: 2, kind: input, shape index: {}]
  %s3 = inlined_call_operand.vmem [shape: f32[1,32], index: 3, kind: input, shape index: {}]
  %s4 = inlined_call_operand.vmem [shape: f32[1,32], index: 4, kind: input, shape index: {}]
  %s5 = inlined_call_operand.vmem [shape: f32[1,32], index: 5, kind: input, shape index: {}]
  %s6 = inlined_call_operand.vmem [shape: bf16[32,128], index: 6, kind: input, shape index: {}]
  %s7 = inlined_call_operand.vmem [shape: f32[1,128], index: 7, kind: input, shape index: {}]
  %s8 = inlined_call_operand.vmem [shape: bf16[128,32], index: 8, kind: input, shape index: {}]
  %s9 = inlined_call_operand.vmem [shape: f32[1,32], index: 9, kind: input, shape index: {}]
  %s10 = inlined_call_operand.hbm [shape: f32[16,32], index: 10, kind: output, shape index: {}]
  %s11 = sld [smem:[#allocation0]]
  $region58: #{transformer_encoder.7} parent=0
    _
  %s13 = ssub.s32 1, %s11
  %s14 = scalar_select 0, %s13, %s11
  $region1: #{transformer_encoder.7} parent=0
    #allocation5 [shape = 'u8[8192]{0}', space=vmem, size = 0x2000, scoped, tag = 'output window, operand 0, single buffered']
    #allocation6 [shape = 's32[1]{0}', space=sflag, size = 0x4, scoped, tag = 'scoped memory for transformer_encoder.7']
    %15 = vsyncpa [#allocation6], 0
    // Predicated region
    $region2: #{transformer_encoder.7} parent=1 // pred_check
      _
    $region3: #{transformer_encoder.7} parent=1 // pred_check_branch
      %17 = sbr.rel (0) target = $region5
    $region4: #{transformer_encoder.7} parent=1 // pred_region
      _
    $region5: #{transformer_encoder.7} parent=1 // pred_fallthru
      _
    // Predicated region
    $region6: #{transformer_encoder.7} parent=1 // pred_check
      _
    $region7: #{transformer_encoder.7} parent=1 // pred_check_branch
      %19 = sbr.rel (0) target = $region9
    $region8: #{transformer_encoder.7} parent=1 // pred_region
      _
    $region9: #{transformer_encoder.7} parent=1 // pred_fallthru
      _
    // Predicated region
    $region10: #{transformer_encoder.7} parent=1 // pred_check
      _
    $region11: #{transformer_encoder.7} parent=1 // pred_check_branch
      %21 = sbr.rel (0) target = $region13
    $region12: #{transformer_encoder.7} parent=1 // pred_region
      _
    $region13: #{transformer_encoder.7} parent=1 // pred_fallthru
      _
    // Predicated region
    $region14: #{transformer_encoder.7} parent=1 // pred_check
      _
    $region15: #{transformer_encoder.7} parent=1 // pred_check_branch
      %23 = sbr.rel (0) target = $region17
    $region16: #{transformer_encoder.7} parent=1 // pred_region
      _
    $region17: #{transformer_encoder.7} parent=1 // pred_fallthru
      _
    // Predicated region
    $region18: #{transformer_encoder.7} parent=1 // pred_check
      _
    $region19: #{transformer_encoder.7} parent=1 // pred_check_branch
      %25 = sbr.rel (0) target = $region21
    $region20: #{transformer_encoder.7} parent=1 // pred_region
      _
    $region21: #{transformer_encoder.7} parent=1 // pred_fallthru
      _
    // Predicated region
    $region22: #{transformer_encoder.7} parent=1 // pred_check
      _
    $region23: #{transformer_encoder.7} parent=1 // pred_check_branch
      %27 = sbr.rel (0) target = $region25
    $region24: #{transformer_encoder.7} parent=1 // pred_region
      _
    $region25: #{transformer_encoder.7} parent=1 // pred_fallthru
      _
    // Predicated region
    $region26: #{transformer_encoder.7} parent=1 // pred_check
      _
    $region27: #{transformer_encoder.7} parent=1 // pred_check_branch
      %29 = sbr.rel (0) target = $region29
    $region28: #{transformer_encoder.7} parent=1 // pred_region
      _
    $region29: #{transformer_encoder.7} parent=1 // pred_fallthru
      _
    // Predicated region
    $region30: #{transformer_encoder.7} parent=1 // pred_check
      _
    $region31: #{transformer_encoder.7} parent=1 // pred_check_branch
      %31 = sbr.rel (0) target = $region33
    $region32: #{transformer_encoder.7} parent=1 // pred_region
      _
    $region33: #{transformer_encoder.7} parent=1 // pred_fallthru
      _
    // Predicated region
    $region34: #{transformer_encoder.7} parent=1 // pred_check
      _
    $region35: #{transformer_encoder.7} parent=1 // pred_check_branch
      %33 = sbr.rel (0) target = $region37
    $region36: #{transformer_encoder.7} parent=1 // pred_region
      _
    $region37: #{transformer_encoder.7} parent=1 // pred_fallthru
      _
    // Predicated region
    $region38: #{transformer_encoder.7} parent=1 // pred_check
      _
    $region39: #{transformer_encoder.7} parent=1 // pred_check_branch
      %35 = sbr.rel (0) target = $region41
    $region40: #{transformer_encoder.7} parent=1 // pred_region
      _
    $region41: #{transformer_encoder.7} parent=1 // pred_fallthru
      _
    %p37 = scmp.eq.s32.totalorder 0, 0
    // Predicated region
    $region42: #{transformer_encoder.7} parent=1 // pred_check
      %p38 = pneg %p37
    $region43: #{transformer_encoder.7} parent=1 // pred_check_branch
      %40 = sbr.rel (%p38) target = $region45
    $region44: #{transformer_encoder.7} parent=1 // pred_region
      %v41 = vld [vmem:[%s1] sm:$0xff]
      %v42 = vld [vmem:[%s1 + $0x8] sm:$0xff]
      %v43 = vld [vmem:[%s0] sm:$0xf]
      %v44 = vld [vmem:[%s0 + $0x4] sm:$0xf]
      %v45 = vld [vmem:[%s2] sm:$0xf]
      %v46 = vld [vmem:[%s2 + $0x4] sm:$0xf]
      %v47 = vld [vmem:[%s2 + $0x8] sm:$0xf]
      %v48 = vld [vmem:[%s2 + $0xc] sm:$0xf]
      %v49 = vld [vmem:[%s3] sm:$0x1]
      %v51 = vlaneseq
      %v52 = vshrl.u32 %v51, 7
      %v53 = vsub.s32 0, %v52
      %v54 = vrot.slane %v49, %v53
      %v58 = vunpack.c.l.b16 %v43
      %v59 = vunpack.c.l.b16 %v44
      %v60 = vpack.c.b16 %v59, %v58
      %v65 = vunpack.c.l.b16 %v45
      %v66 = vunpack.c.l.b16 %v46
      %v67 = vunpack.c.l.b16 %v47
      %v68 = vunpack.c.l.b16 %v48
      %v69 = vpack.c.b16 %v66, %v65
      %v70 = vpack.c.b16 %v68, %v67
      %vm73 = vcmask 261120
      %v75 = vsel %vm73, %v60, 0
      %77 = vmatprep.subr.bf16.mxu0 0
      %78 = vmatpush1.bf16.msra.mxu0 %v69
      %79 = vmatprep.subr.bf16.mxu0 0
      %80 = vmatpush1.bf16.msra.mxu0 %v70
      %81 = vmatprep.subr.bf16.mxu0 0
      %82 = vmatpush1.bf16.msra.mxu0 0
      %83 = vmatprep.subr.bf16.mxu0 0
      %84 = vmatpush1.bf16.msra.mxu0 0
      %85 = vmatprep.subr.bf16.mxu0 0
      %86 = vmatpush1.bf16.msra.mxu0 0
      %87 = vmatprep.subr.bf16.mxu0 0
      %88 = vmatpush1.bf16.msra.mxu0 0
      %89 = vmatprep.subr.bf16.mxu0 0
      %90 = vmatpush1.bf16.msra.mxu0 0
      %91 = vmatprep.subr.bf16.mxu0 0
      %92 = vmatpush1.bf16.msra.mxu0 0
      %93 = vmatprep.subr.bf16.mxu0 0
      %94 = vmatpush1.bf16.msra.mxu0 0
      %95 = vmatprep.subr.bf16.mxu0 0
      %96 = vmatpush1.bf16.msra.mxu0 0
      %97 = vmatprep.subr.bf16.mxu0 0
      %98 = vmatpush1.bf16.msra.mxu0 0
      %99 = vmatprep.subr.bf16.mxu0 0
      %100 = vmatpush1.bf16.msra.mxu0 0
      %101 = vmatprep.subr.bf16.mxu0 0
      %102 = vmatpush1.bf16.msra.mxu0 0
      %103 = vmatprep.subr.bf16.mxu0 0
      %104 = vmatpush1.bf16.msra.mxu0 0
      %105 = vmatprep.subr.bf16.mxu0 0
      %106 = vmatpush1.bf16.msra.mxu0 0
      %107 = vmatprep.subr.bf16.mxu0 0
      %108 = vmatpush1.bf16.msra.mxu0 0
      %109 = vmatprep.mubr.bf16.mxu0 0
      %110 = vmatmul.mubr.bf16.gmra.mrb[0].mxu0 %v75
      %v111 = vpop.f32.mrb[0].mxu0
      %v112 = vadd.f32 %v54, %v111
      %v113 = vpop.f32.mrb[0].mxu0
      %v114 = vpop.f32.mrb[0].mxu0
      %v115 = vadd.f32 %v54, %v114
      %v116 = vpop.f32.mrb[0].mxu0
      %117 = vdwg.mxu0
      %v118 = vadd.f32 %v41, %v112
      %v119 = vadd.f32 %v42, %v115
      %120 = vst.msk [vmem:[#allocation2] sm:$0xff] %vm73, %v118
      %121 = vst.msk [vmem:[#allocation2 + $0x8] sm:$0xff] %vm73, %v119
      %v122 = vld [vmem:[%s4] sm:$0x1]
      %v123 = vld [vmem:[%s5] sm:$0x1]
      %v124 = vsel %vm73, %v118, 0.0
      %125 = vadd.xlane.f32.xlu0 %v124
      %v126 = vpop.xlane.xlu0 %125
      %v127 = vsel %vm73, %v119, 0.0
      %128 = vadd.xlane.f32.xlu0 %v127
      %v129 = vpop.xlane.xlu0 %128
      %v130 = vrcp.pop 32.0
      %v131 = vmul.f32 %v126, %v130
      %v132 = vmul.f32 %v129, %v130
      %v133 = vsub.f32 %v118, %v131
      %v134 = vsub.f32 %v119, %v132
      %v135 = vmul.f32 %v133, %v133
      %v136 = vmul.f32 %v134, %v134
      %v137 = vsel %vm73, %v135, 0.0
      %138 = vadd.xlane.f32.xlu0 %v137
      %v139 = vpop.xlane.xlu0 %138
      %v140 = vsel %vm73, %v136, 0.0
      %141 = vadd.xlane.f32.xlu0 %v140
      %v142 = vpop.xlane.xlu0 %141
      %v143 = vmul.f32 %v139, %v130
      %v144 = vmul.f32 %v142, %v130
      %v145 = vadd.f32 %v143, 1e-05
      %v146 = vadd.f32 %v144, 1e-05
      %v147 = vrsqrt.pop %v145
      %v148 = vrsqrt.pop %v146
      %v149 = vmul.f32 %v133, %v147
      %v150 = vmul.f32 %v134, %v148
      %v152 = vlaneseq
      %v153 = vshrl.u32 %v152, 7
      %v154 = vsub.s32 0, %v153
      %v155 = vrot.slane %v122, %v154
      %v157 = vmul.f32 %v149, %v155
      %v158 = vmul.f32 %v150, %v155
      %v160 = vlaneseq
      %v161 = vshrl.u32 %v160, 7
      %v162 = vsub.s32 0, %v161
      %v163 = vrot.slane %v123, %v162
      %v165 = vadd.f32 %v157, %v163
      %v166 = vadd.f32 %v158, %v163
      %v167 = vpack.c.bf16 %v166, %v165
      %168 = vst.msk [vmem:[#allocation3] sm:$0xff] %vm73, %v167
      %169 = vst.msk [vmem:[#allocation4] sm:$0xff] %vm73, 0.0
      %170 = vst.msk [vmem:[#allocation4 + $0x8] sm:$0xff] %vm73, 0.0
    $region45: #{transformer_encoder.7} parent=1 // pred_fallthru
      _
    %v171 = vld [vmem:[#allocation3] sm:$0xff]
    %v172 = vld [vmem:[%s6] sm:$0xf]
    %v173 = vld [vmem:[%s6 + $0x4] sm:$0xf]
    %v174 = vld [vmem:[%s6 + $0x8] sm:$0xf]
    %v175 = vld [vmem:[%s6 + $0xc] sm:$0xf]
    %v176 = vld [vmem:[%s7] sm:$0x1]
    %v178 = vlaneseq
    %v179 = vshrl.u32 %v178, 7
    %v180 = vsub.s32 0, %v179
    %v181 = vrot.slane %v176, %v180
    %v187 = vunpack.c.l.b16 %v172
    %v188 = vunpack.c.l.b16 %v173
    %v189 = vunpack.c.l.b16 %v174
    %v190 = vunpack.c.l.b16 %v175
    %v191 = vpack.c.b16 %v188, %v187
    %v192 = vpack.c.b16 %v190, %v189
    %vm195 = vcmask 261120
    %v197 = vsel %vm195, %v171, 0
    %199 = vmatprep.subr.bf16.mxu0 0
    %200 = vmatpush1.bf16.msra.mxu0 %v191
    %201 = vmatprep.subr.bf16.mxu0 0
    %202 = vmatpush1.bf16.msra.mxu0 %v192
    %203 = vmatprep.subr.bf16.mxu0 0
    %204 = vmatpush1.bf16.msra.mxu0 0
    %205 = vmatprep.subr.bf16.mxu0 0
    %206 = vmatpush1.bf16.msra.mxu0 0
    %207 = vmatprep.subr.bf16.mxu0 0
    %208 = vmatpush1.bf16.msra.mxu0 0
    %209 = vmatprep.subr.bf16.mxu0 0
    %210 = vmatpush1.bf16.msra.mxu0 0
    %211 = vmatprep.subr.bf16.mxu0 0
    %212 = vmatpush1.bf16.msra.mxu0 0
    %213 = vmatprep.subr.bf16.mxu0 0
    %214 = vmatpush1.bf16.msra.mxu0 0
    %215 = vmatprep.subr.bf16.mxu0 0
    %216 = vmatpush1.bf16.msra.mxu0 0
    %217 = vmatprep.subr.bf16.mxu0 0
    %218 = vmatpush1.bf16.msra.mxu0 0
    %219 = vmatprep.subr.bf16.mxu0 0
    %220 = vmatpush1.bf16.msra.mxu0 0
    %221 = vmatprep.subr.bf16.mxu0 0
    %222 = vmatpush1.bf16.msra.mxu0 0
    %223 = vmatprep.subr.bf16.mxu0 0
    %224 = vmatpush1.bf16.msra.mxu0 0
    %225 = vmatprep.subr.bf16.mxu0 0
    %226 = vmatpush1.bf16.msra.mxu0 0
    %227 = vmatprep.subr.bf16.mxu0 0
    %228 = vmatpush1.bf16.msra.mxu0 0
    %229 = vmatprep.subr.bf16.mxu0 0
    %230 = vmatpush1.bf16.msra.mxu0 0
    %231 = vmatprep.mubr.bf16.mxu0 0
    %232 = vmatmul.mubr.bf16.gmra.mrb[0].mxu0 %v197
    %v233 = vpop.f32.mrb[0].mxu0
    %v234 = vadd.f32 %v181, %v233
    %v235 = vpop.f32.mrb[0].mxu0
    %v236 = vpop.f32.mrb[0].mxu0
    %v237 = vadd.f32 %v181, %v236
    %v238 = vpop.f32.mrb[0].mxu0
    %239 = vdwg.mxu0
    %v240 = vmul.f32 %v234, 0.5
    %v241 = vmul.f32 %v237, 0.5
    %v242 = vmul.f32 %v234, 0.044715
    %v243 = vmul.f32 %v237, 0.044715
    %v244 = vmul.f32 %v242, %v234
    %v245 = vmul.f32 %v243, %v237
    %v246 = vmul.f32 %v244, %v234
    %v247 = vmul.f32 %v245, %v237
    %v248 = vadd.f32 %v234, %v246
    %v249 = vadd.f32 %v237, %v247
    %v250 = vmul.f32 %v248, 0.7978846
    %v251 = vmul.f32 %v249, 0.7978846
    %v252 = vtanh.pop %v250
    %v253 = vtanh.pop %v251
    %v254 = vadd.f32 %v252, 1.0
    %v255 = vadd.f32 %v253, 1.0
    %v256 = vmul.f32 %v240, %v254
    %v257 = vmul.f32 %v241, %v255
    %v258 = vld [vmem:[#allocation4] sm:$0xff]
    %v259 = vld [vmem:[#allocation4 + $0x8] sm:$0xff]
    %v260 = vpack.c.bf16 %v257, %v256
    %v261 = vld [vmem:[%s8] sm:$0xf]
    %v262 = vld [vmem:[%s8 + $0x4] sm:$0xf]
    %v263 = vld [vmem:[%s8 + $0x8] sm:$0xf]
    %v264 = vld [vmem:[%s8 + $0xc] sm:$0xf]
    %v265 = vld [vmem:[%s8 + $0x10] sm:$0xf]
    %v266 = vld [vmem:[%s8 + $0x14] sm:$0xf]
    %v267 = vld [vmem:[%s8 + $0x18] sm:$0xf]
    %v268 = vld [vmem:[%s8 + $0x1c] sm:$0xf]
    %v269 = vld [vmem:[%s8 + $0x20] sm:$0xf]
    %v270 = vld [vmem:[%s8 + $0x24] sm:$0xf]
    %v271 = vld [vmem:[%s8 + $0x28] sm:$0xf]
    %v272 = vld [vmem:[%s8 + $0x2c] sm:$0xf]
    %v273 = vld [vmem:[%s8 + $0x30] sm:$0xf]
    %v274 = vld [vmem:[%s8 + $0x34] sm:$0xf]
    %v275 = vld [vmem:[%s8 + $0x38] sm:$0xf]
    %v276 = vld [vmem:[%s8 + $0x3c] sm:$0xf]
    %v293 = vunpack.c.l.b16 %v261
    %v294 = vunpack.c.l.b16 %v262
    %v295 = vunpack.c.l.b16 %v263
    %v296 = vunpack.c.l.b16 %v264
    %v297 = vunpack.c.l.b16 %v265
    %v298 = vunpack.c.l.b16 %v266
    %v299 = vunpack.c.l.b16 %v267
    %v300 = vunpack.c.l.b16 %v268
    %v301 = vunpack.c.l.b16 %v269
    %v302 = vunpack.c.l.b16 %v270
    %v303 = vunpack.c.l.b16 %v271
    %v304 = vunpack.c.l.b16 %v272
    %v305 = vunpack.c.l.b16 %v273
    %v306 = vunpack.c.l.b16 %v274
    %v307 = vunpack.c.l.b16 %v275
    %v308 = vunpack.c.l.b16 %v276
    %v309 = vpack.c.b16 %v294, %v293
    %v310 = vpack.c.b16 %v296, %v295
    %v311 = vpack.c.b16 %v298, %v297
    %v312 = vpack.c.b16 %v300, %v299
    %v313 = vpack.c.b16 %v302, %v301
    %v314 = vpack.c.b16 %v304, %v303
    %v315 = vpack.c.b16 %v306, %v305
    %v316 = vpack.c.b16 %v308, %v307
    %325 = vmatprep.subr.bf16.mxu0 0
    %326 = vmatpush1.bf16.msra.mxu0 %v309
    %327 = vmatprep.subr.bf16.mxu0 0
    %328 = vmatpush1.bf16.msra.mxu0 %v310
    %329 = vmatprep.subr.bf16.mxu0 0
    %330 = vmatpush1.bf16.msra.mxu0 %v311
    %331 = vmatprep.subr.bf16.mxu0 0
    %332 = vmatpush1.bf16.msra.mxu0 %v312
    %333 = vmatprep.subr.bf16.mxu0 0
    %334 = vmatpush1.bf16.msra.mxu0 %v313
    %335 = vmatprep.subr.bf16.mxu0 0
    %336 = vmatpush1.bf16.msra.mxu0 %v314
    %337 = vmatprep.subr.bf16.mxu0 0
    %338 = vmatpush1.bf16.msra.mxu0 %v315
    %339 = vmatprep.subr.bf16.mxu0 0
    %340 = vmatpush1.bf16.msra.mxu0 %v316
    %341 = vmatprep.subr.bf16.mxu0 0
    %342 = vmatpush1.bf16.msra.mxu0 0
    %343 = vmatprep.subr.bf16.mxu0 0
    %344 = vmatpush1.bf16.msra.mxu0 0
    %345 = vmatprep.subr.bf16.mxu0 0
    %346 = vmatpush1.bf16.msra.mxu0 0
    %347 = vmatprep.subr.bf16.mxu0 0
    %348 = vmatpush1.bf16.msra.mxu0 0
    %349 = vmatprep.subr.bf16.mxu0 0
    %350 = vmatpush1.bf16.msra.mxu0 0
    %351 = vmatprep.subr.bf16.mxu0 0
    %352 = vmatpush1.bf16.msra.mxu0 0
    %353 = vmatprep.subr.bf16.mxu0 0
    %354 = vmatpush1.bf16.msra.mxu0 0
    %355 = vmatprep.subr.bf16.mxu0 0
    %356 = vmatpush1.bf16.msra.mxu0 0
    %357 = vmatprep.mubr.bf16.mxu0 0
    %358 = vmatmul.mubr.bf16.gmra.mrb[0].mxu0 %v260
    %v359 = vpop.f32.mrb[0].mxu0
    %v360 = vadd.f32 0.0, %v359
    %v361 = vpop.f32.mrb[0].mxu0
    %v362 = vpop.f32.mrb[0].mxu0
    %v363 = vadd.f32 0.0, %v362
    %v364 = vpop.f32.mrb[0].mxu0
    %365 = vdwg.mxu0
    %v366 = vadd.f32 %v258, %v360
    %v367 = vadd.f32 %v259, %v363
    %368 = vst.msk [vmem:[#allocation4] sm:$0xff] %vm195, %v366
    %369 = vst.msk [vmem:[#allocation4 + $0x8] sm:$0xff] %vm195, %v367
    // Predicated region
    $region46: #{transformer_encoder.7} parent=1 // pred_check
      %p370 = pneg %p37
    $region47: #{transformer_encoder.7} parent=1 // pred_check_branch
      %372 = sbr.rel (%p370) target = $region49
    $region48: #{transformer_encoder.7} parent=1 // pred_region
      %v373 = vld [vmem:[#allocation2] sm:$0xff]
      %v374 = vld [vmem:[#allocation2 + $0x8] sm:$0xff]
      %v375 = vld [vmem:[#allocation4] sm:$0xff]
      %v376 = vld [vmem:[#allocation4 + $0x8] sm:$0xff]
      %v377 = vadd.f32 %v373, %v375
      %v378 = vadd.f32 %v374, %v376
      %v379 = vld [vmem:[%s9] sm:$0x1]
      %v381 = vlaneseq
      %v382 = vshrl.u32 %v381, 7
      %v383 = vsub.s32 0, %v382
      %v384 = vrot.slane %v379, %v383
      %v386 = vadd.f32 %v377, %v384
      %v387 = vadd.f32 %v378, %v384
      %388 = vst.msk [vmem:[#allocation5] sm:$0xff] %vm195, %v386
      %389 = vst.msk [vmem:[#allocation5 + $0x8] sm:$0xff] %vm195, %v387
    $region49: #{transformer_encoder.7} parent=1 // pred_fallthru
      _
    // Predicated region
    $region50: #{transformer_encoder.7} parent=1 // pred_check
      _
    $region51: #{transformer_encoder.7} parent=1 // pred_check_branch
      %391 = sbr.rel (0) target = $region53
    $region52: #{transformer_encoder.7} parent=1 // pred_region
      %s393 = ssub.s32 256, 256
      %394 = vsyncadd [#allocation6], %s393
      %s395 = sshll.u32 [#allocation5], 4
      %s396 = int_to_ptr.vmem [resolvable:$true] %s395
      %401 = dma.vmem_to_hbm [thread:$0]  %s396, 256, %s10, [#allocation6], 128, 128, 8
    $region53: #{transformer_encoder.7} parent=1 // pred_fallthru
      _
    // Predicated region
    $region54: #{transformer_encoder.7} parent=1 // pred_check
      _
    $region55: #{transformer_encoder.7} parent=1 // pred_check_branch
      %403 = sbr.rel (0) target = $region57
    $region56: #{transformer_encoder.7} parent=1 // pred_region
      %404 = dma.done [#allocation6], 256
    $region57: #{transformer_encoder.7} parent=1 // pred_fallthru
      _
    %405 = vsyncpa [#allocation6], 1

// kernel: transformer_encoder.5
$region0: #{transformer_encoder.5}
  #allocation0 [shape = 'u32[]', space=smem, size = 0x4, offset = 0x4, fixed_abs, tag = 'smem constant byte address 0x4 - core index']
  #allocation1 [shape = 'u32[144,128]{1,0:T(1,128)}', space=vmem, size = 0x12000, scoped, tag = 'internal scratch']
  #allocation2 [shape = 'f32[16,32]{1,0:T(8,128)}', space=vmem, size = 0x2000, scoped, tag = 'scratch operand']
  #allocation3 [shape = 'bf16[16,32]{1,0:T(16,128)(2,1)}', space=vmem, size = 0x1000, scoped, tag = 'scratch operand']
  #allocation4 [shape = 'f32[16,32]{1,0:T(8,128)}', space=vmem, size = 0x2000, scoped, tag = 'scratch operand']
  %s0 = inlined_call_operand.vmem [shape: bf16[16,32], index: 0, kind: input, shape index: {}]
  %s1 = inlined_call_operand.vmem [shape: f32[16,32], index: 1, kind: input, shape index: {}]
  %s2 = inlined_call_operand.vmem [shape: bf16[32,32], index: 2, kind: input, shape index: {}]
  %s3 = inlined_call_operand.vmem [shape: f32[1,32], index: 3, kind: input, shape index: {}]
  %s4 = inlined_call_operand.vmem [shape: f32[1,32], index: 4, kind: input, shape index: {}]
  %s5 = inlined_call_operand.vmem [shape: f32[1,32], index: 5, kind: input, shape index: {}]
  %s6 = inlined_call_operand.vmem [shape: bf16[32,128], index: 6, kind: input, shape index: {}]
  %s7 = inlined_call_operand.vmem [shape: f32[1,128], index: 7, kind: input, shape index: {}]
  %s8 = inlined_call_operand.vmem [shape: bf16[128,32], index: 8, kind: input, shape index: {}]
  %s9 = inlined_call_operand.vmem [shape: f32[1,32], index: 9, kind: input, shape index: {}]
  %s10 = inlined_call_operand.vmem [shape: f32[16,32], index: 10, kind: output, shape index: {}]
  %s11 = sld [smem:[#allocation0]]
  $region58: #{transformer_encoder.5} parent=0
    _
  %s13 = ssub.s32 1, %s11
  %s14 = scalar_select 0, %s13, %s11
  // Predicated region
  $region2: #{transformer_encoder.5} parent=0 // pred_check
    _
  $region3: #{transformer_encoder.5} parent=0 // pred_check_branch
    %16 = sbr.rel (0) target = $region5
  $region4: #{transformer_encoder.5} parent=0 // pred_region
    _
  $region5: #{transformer_encoder.5} parent=0 // pred_fallthru
    _
  // Predicated region
  $region6: #{transformer_encoder.5} parent=0 // pred_check
    _
  $region7: #{transformer_encoder.5} parent=0 // pred_check_branch
    %18 = sbr.rel (0) target = $region9
  $region8: #{transformer_encoder.5} parent=0 // pred_region
    _
  $region9: #{transformer_encoder.5} parent=0 // pred_fallthru
    _
  // Predicated region
  $region10: #{transformer_encoder.5} parent=0 // pred_check
    _
  $region11: #{transformer_encoder.5} parent=0 // pred_check_branch
    %20 = sbr.rel (0) target = $region13
  $region12: #{transformer_encoder.5} parent=0 // pred_region
    _
  $region13: #{transformer_encoder.5} parent=0 // pred_fallthru
    _
  // Predicated region
  $region14: #{transformer_encoder.5} parent=0 // pred_check
    _
  $region15: #{transformer_encoder.5} parent=0 // pred_check_branch
    %22 = sbr.rel (0) target = $region17
  $region16: #{transformer_encoder.5} parent=0 // pred_region
    _
  $region17: #{transformer_encoder.5} parent=0 // pred_fallthru
    _
  // Predicated region
  $region18: #{transformer_encoder.5} parent=0 // pred_check
    _
  $region19: #{transformer_encoder.5} parent=0 // pred_check_branch
    %24 = sbr.rel (0) target = $region21
  $region20: #{transformer_encoder.5} parent=0 // pred_region
    _
  $region21: #{transformer_encoder.5} parent=0 // pred_fallthru
    _
  // Predicated region
  $region22: #{transformer_encoder.5} parent=0 // pred_check
    _
  $region23: #{transformer_encoder.5} parent=0 // pred_check_branch
    %26 = sbr.rel (0) target = $region25
  $region24: #{transformer_encoder.5} parent=0 // pred_region
    _
  $region25: #{transformer_encoder.5} parent=0 // pred_fallthru
    _
  // Predicated region
  $region26: #{transformer_encoder.5} parent=0 // pred_check
    _
  $region27: #{transformer_encoder.5} parent=0 // pred_check_branch
    %28 = sbr.rel (0) target = $region29
  $region28: #{transformer_encoder.5} parent=0 // pred_region
    _
  $region29: #{transformer_encoder.5} parent=0 // pred_fallthru
    _
  // Predicated region
  $region30: #{transformer_encoder.5} parent=0 // pred_check
    _
  $region31: #{transformer_encoder.5} parent=0 // pred_check_branch
    %30 = sbr.rel (0) target = $region33
  $region32: #{transformer_encoder.5} parent=0 // pred_region
    _
  $region33: #{transformer_encoder.5} parent=0 // pred_fallthru
    _
  // Predicated region
  $region34: #{transformer_encoder.5} parent=0 // pred_check
    _
  $region35: #{transformer_encoder.5} parent=0 // pred_check_branch
    %32 = sbr.rel (0) target = $region37
  $region36: #{transformer_encoder.5} parent=0 // pred_region
    _
  $region37: #{transformer_encoder.5} parent=0 // pred_fallthru
    _
  // Predicated region
  $region38: #{transformer_encoder.5} parent=0 // pred_check
    _
  $region39: #{transformer_encoder.5} parent=0 // pred_check_branch
    %34 = sbr.rel (0) target = $region41
  $region40: #{transformer_encoder.5} parent=0 // pred_region
    _
  $region41: #{transformer_encoder.5} parent=0 // pred_fallthru
    _
  %p36 = scmp.eq.s32.totalorder 0, 0
  // Predicated region
  $region42: #{transformer_encoder.5} parent=0 // pred_check
    %p37 = pneg %p36
  $region43: #{transformer_encoder.5} parent=0 // pred_check_branch
    %39 = sbr.rel (%p37) target = $region45
  $region44: #{transformer_encoder.5} parent=0 // pred_region
    %v40 = vld [vmem:[%s1] sm:$0xff]
    %v41 = vld [vmem:[%s1 + $0x8] sm:$0xff]
    %v42 = vld [vmem:[%s0] sm:$0xf]
    %v43 = vld [vmem:[%s0 + $0x4] sm:$0xf]
    %v44 = vld [vmem:[%s2] sm:$0xf]
    %v45 = vld [vmem:[%s2 + $0x4] sm:$0xf]
    %v46 = vld [vmem:[%s2 + $0x8] sm:$0xf]
    %v47 = vld [vmem:[%s2 + $0xc] sm:$0xf]
    %v48 = vld [vmem:[%s3] sm:$0x1]
    %v50 = vlaneseq
    %v51 = vshrl.u32 %v50, 7
    %v52 = vsub.s32 0, %v51
    %v53 = vrot.slane %v48, %v52
    %v57 = vunpack.c.l.b16 %v42
    %v58 = vunpack.c.l.b16 %v43
    %v59 = vpack.c.b16 %v58, %v57
    %v64 = vunpack.c.l.b16 %v44
    %v65 = vunpack.c.l.b16 %v45
    %v66 = vunpack.c.l.b16 %v46
    %v67 = vunpack.c.l.b16 %v47
    %v68 = vpack.c.b16 %v65, %v64
    %v69 = vpack.c.b16 %v67, %v66
    %vm72 = vcmask 261120
    %v74 = vsel %vm72, %v59, 0
    %76 = vmatprep.subr.bf16.mxu0 0
    %77 = vmatpush1.bf16.msra.mxu0 %v68
    %78 = vmatprep.subr.bf16.mxu0 0
    %79 = vmatpush1.bf16.msra.mxu0 %v69
    %80 = vmatprep.subr.bf16.mxu0 0
    %81 = vmatpush1.bf16.msra.mxu0 0
    %82 = vmatprep.subr.bf16.mxu0 0
    %83 = vmatpush1.bf16.msra.mxu0 0
    %84 = vmatprep.subr.bf16.mxu0 0
    %85 = vmatpush1.bf16.msra.mxu0 0
    %86 = vmatprep.subr.bf16.mxu0 0
    %87 = vmatpush1.bf16.msra.mxu0 0
    %88 = vmatprep.subr.bf16.mxu0 0
    %89 = vmatpush1.bf16.msra.mxu0 0
    %90 = vmatprep.subr.bf16.mxu0 0
    %91 = vmatpush1.bf16.msra.mxu0 0
    %92 = vmatprep.subr.bf16.mxu0 0
    %93 = vmatpush1.bf16.msra.mxu0 0
    %94 = vmatprep.subr.bf16.mxu0 0
    %95 = vmatpush1.bf16.msra.mxu0 0
    %96 = vmatprep.subr.bf16.mxu0 0
    %97 = vmatpush1.bf16.msra.mxu0 0
    %98 = vmatprep.subr.bf16.mxu0 0
    %99 = vmatpush1.bf16.msra.mxu0 0
    %100 = vmatprep.subr.bf16.mxu0 0
    %101 = vmatpush1.bf16.msra.mxu0 0
    %102 = vmatprep.subr.bf16.mxu0 0
    %103 = vmatpush1.bf16.msra.mxu0 0
    %104 = vmatprep.subr.bf16.mxu0 0
    %105 = vmatpush1.bf16.msra.mxu0 0
    %106 = vmatprep.subr.bf16.mxu0 0
    %107 = vmatpush1.bf16.msra.mxu0 0
    %108 = vmatprep.mubr.bf16.mxu0 0
    %109 = vmatmul.mubr.bf16.gmra.mrb[0].mxu0 %v74
    %v110 = vpop.f32.mrb[0].mxu0
    %v111 = vadd.f32 %v53, %v110
    %v112 = vpop.f32.mrb[0].mxu0
    %v113 = vpop.f32.mrb[0].mxu0
    %v114 = vadd.f32 %v53, %v113
    %v115 = vpop.f32.mrb[0].mxu0
    %116 = vdwg.mxu0
    %v117 = vadd.f32 %v40, %v111
    %v118 = vadd.f32 %v41, %v114
    %119 = vst.msk [vmem:[#allocation2] sm:$0xff] %vm72, %v117
    %120 = vst.msk [vmem:[#allocation2 + $0x8] sm:$0xff] %vm72, %v118
    %v121 = vld [vmem:[%s4] sm:$0x1]
    %v122 = vld [vmem:[%s5] sm:$0x1]
    %v123 = vsel %vm72, %v117, 0.0
    %124 = vadd.xlane.f32.xlu0 %v123
    %v125 = vpop.xlane.xlu0 %124
    %v126 = vsel %vm72, %v118, 0.0
    %127 = vadd.xlane.f32.xlu0 %v126
    %v128 = vpop.xlane.xlu0 %127
    %v129 = vrcp.pop 32.0
    %v130 = vmul.f32 %v125, %v129
    %v131 = vmul.f32 %v128, %v129
    %v132 = vsub.f32 %v117, %v130
    %v133 = vsub.f32 %v118, %v131
    %v134 = vmul.f32 %v132, %v132
    %v135 = vmul.f32 %v133, %v133
    %v136 = vsel %vm72, %v134, 0.0
    %137 = vadd.xlane.f32.xlu0 %v136
    %v138 = vpop.xlane.xlu0 %137
    %v139 = vsel %vm72, %v135, 0.0
    %140 = vadd.xlane.f32.xlu0 %v139
    %v141 = vpop.xlane.xlu0 %140
    %v142 = vmul.f32 %v138, %v129
    %v143 = vmul.f32 %v141, %v129
    %v144 = vadd.f32 %v142, 1e-05
    %v145 = vadd.f32 %v143, 1e-05
    %v146 = vrsqrt.pop %v144
    %v147 = vrsqrt.pop %v145
    %v148 = vmul.f32 %v132, %v146
    %v149 = vmul.f32 %v133, %v147
    %v151 = vlaneseq
    %v152 = vshrl.u32 %v151, 7
    %v153 = vsub.s32 0, %v152
    %v154 = vrot.slane %v121, %v153
    %v156 = vmul.f32 %v148, %v154
    %v157 = vmul.f32 %v149, %v154
    %v159 = vlaneseq
    %v160 = vshrl.u32 %v159, 7
    %v161 = vsub.s32 0, %v160
    %v162 = vrot.slane %v122, %v161
    %v164 = vadd.f32 %v156, %v162
    %v165 = vadd.f32 %v157, %v162
    %v166 = vpack.c.bf16 %v165, %v164
    %167 = vst.msk [vmem:[#allocation3] sm:$0xff] %vm72, %v166
    %168 = vst.msk [vmem:[#allocation4] sm:$0xff] %vm72, 0.0
    %169 = vst.msk [vmem:[#allocation4 + $0x8] sm:$0xff] %vm72, 0.0
  $region45: #{transformer_encoder.5} parent=0 // pred_fallthru
    _
  %v170 = vld [vmem:[#allocation3] sm:$0xff]
  %v171 = vld [vmem:[%s6] sm:$0xf]
  %v172 = vld [vmem:[%s6 + $0x4] sm:$0xf]
  %v173 = vld [vmem:[%s6 + $0x8] sm:$0xf]
  %v174 = vld [vmem:[%s6 + $0xc] sm:$0xf]
  %v175 = vld [vmem:[%s7] sm:$0x1]
  %v177 = vlaneseq
  %v178 = vshrl.u32 %v177, 7
  %v179 = vsub.s32 0, %v178
  %v180 = vrot.slane %v175, %v179
  %v186 = vunpack.c.l.b16 %v171
  %v187 = vunpack.c.l.b16 %v172
  %v188 = vunpack.c.l.b16 %v173
  %v189 = vunpack.c.l.b16 %v174
  %v190 = vpack.c.b16 %v187, %v186
  %v191 = vpack.c.b16 %v189, %v188
  %vm194 = vcmask 261120
  %v196 = vsel %vm194, %v170, 0
  %198 = vmatprep.subr.bf16.mxu0 0
  %199 = vmatpush1.bf16.msra.mxu0 %v190
  %200 = vmatprep.subr.bf16.mxu0 0
  %201 = vmatpush1.bf16.msra.mxu0 %v191
  %202 = vmatprep.subr.bf16.mxu0 0
  %203 = vmatpush1.bf16.msra.mxu0 0
  %204 = vmatprep.subr.bf16.mxu0 0
  %205 = vmatpush1.bf16.msra.mxu0 0
  %206 = vmatprep.subr.bf16.mxu0 0
  %207 = vmatpush1.bf16.msra.mxu0 0
  %208 = vmatprep.subr.bf16.mxu0 0
  %209 = vmatpush1.bf16.msra.mxu0 0
  %210 = vmatprep.subr.bf16.mxu0 0
  %211 = vmatpush1.bf16.msra.mxu0 0
  %212 = vmatprep.subr.bf16.mxu0 0
  %213 = vmatpush1.bf16.msra.mxu0 0
  %214 = vmatprep.subr.bf16.mxu0 0
  %215 = vmatpush1.bf16.msra.mxu0 0
  %216 = vmatprep.subr.bf16.mxu0 0
  %217 = vmatpush1.bf16.msra.mxu0 0
  %218 = vmatprep.subr.bf16.mxu0 0
  %219 = vmatpush1.bf16.msra.mxu0 0
  %220 = vmatprep.subr.bf16.mxu0 0
  %221 = vmatpush1.bf16.msra.mxu0 0
  %222 = vmatprep.subr.bf16.mxu0 0
  %223 = vmatpush1.bf16.msra.mxu0 0
  %224 = vmatprep.subr.bf16.mxu0 0
  %225 = vmatpush1.bf16.msra.mxu0 0
  %226 = vmatprep.subr.bf16.mxu0 0
  %227 = vmatpush1.bf16.msra.mxu0 0
  %228 = vmatprep.subr.bf16.mxu0 0
  %229 = vmatpush1.bf16.msra.mxu0 0
  %230 = vmatprep.mubr.bf16.mxu0 0
  %231 = vmatmul.mubr.bf16.gmra.mrb[0].mxu0 %v196
  %v232 = vpop.f32.mrb[0].mxu0
  %v233 = vadd.f32 %v180, %v232
  %v234 = vpop.f32.mrb[0].mxu0
  %v235 = vpop.f32.mrb[0].mxu0
  %v236 = vadd.f32 %v180, %v235
  %v237 = vpop.f32.mrb[0].mxu0
  %238 = vdwg.mxu0
  %v239 = vmul.f32 %v233, 0.5
  %v240 = vmul.f32 %v236, 0.5
  %v241 = vmul.f32 %v233, 0.044715
  %v242 = vmul.f32 %v236, 0.044715
  %v243 = vmul.f32 %v241, %v233
  %v244 = vmul.f32 %v242, %v236
  %v245 = vmul.f32 %v243, %v233
  %v246 = vmul.f32 %v244, %v236
  %v247 = vadd.f32 %v233, %v245
  %v248 = vadd.f32 %v236, %v246
  %v249 = vmul.f32 %v247, 0.7978846
  %v250 = vmul.f32 %v248, 0.7978846
  %v251 = vtanh.pop %v249
  %v252 = vtanh.pop %v250
  %v253 = vadd.f32 %v251, 1.0
  %v254 = vadd.f32 %v252, 1.0
  %v255 = vmul.f32 %v239, %v253
  %v256 = vmul.f32 %v240, %v254
  %v257 = vld [vmem:[#allocation4] sm:$0xff]
  %v258 = vld [vmem:[#allocation4 + $0x8] sm:$0xff]
  %v259 = vpack.c.bf16 %v256, %v255
  %v260 = vld [vmem:[%s8] sm:$0xf]
  %v261 = vld [vmem:[%s8 + $0x4] sm:$0xf]
  %v262 = vld [vmem:[%s8 + $0x8] sm:$0xf]
  %v263 = vld [vmem:[%s8 + $0xc] sm:$0xf]
  %v264 = vld [vmem:[%s8 + $0x10] sm:$0xf]
  %v265 = vld [vmem:[%s8 + $0x14] sm:$0xf]
  %v266 = vld [vmem:[%s8 + $0x18] sm:$0xf]
  %v267 = vld [vmem:[%s8 + $0x1c] sm:$0xf]
  %v268 = vld [vmem:[%s8 + $0x20] sm:$0xf]
  %v269 = vld [vmem:[%s8 + $0x24] sm:$0xf]
  %v270 = vld [vmem:[%s8 + $0x28] sm:$0xf]
  %v271 = vld [vmem:[%s8 + $0x2c] sm:$0xf]
  %v272 = vld [vmem:[%s8 + $0x30] sm:$0xf]
  %v273 = vld [vmem:[%s8 + $0x34] sm:$0xf]
  %v274 = vld [vmem:[%s8 + $0x38] sm:$0xf]
  %v275 = vld [vmem:[%s8 + $0x3c] sm:$0xf]
  %v292 = vunpack.c.l.b16 %v260
  %v293 = vunpack.c.l.b16 %v261
  %v294 = vunpack.c.l.b16 %v262
  %v295 = vunpack.c.l.b16 %v263
  %v296 = vunpack.c.l.b16 %v264
  %v297 = vunpack.c.l.b16 %v265
  %v298 = vunpack.c.l.b16 %v266
  %v299 = vunpack.c.l.b16 %v267
  %v300 = vunpack.c.l.b16 %v268
  %v301 = vunpack.c.l.b16 %v269
  %v302 = vunpack.c.l.b16 %v270
  %v303 = vunpack.c.l.b16 %v271
  %v304 = vunpack.c.l.b16 %v272
  %v305 = vunpack.c.l.b16 %v273
  %v306 = vunpack.c.l.b16 %v274
  %v307 = vunpack.c.l.b16 %v275
  %v308 = vpack.c.b16 %v293, %v292
  %v309 = vpack.c.b16 %v295, %v294
  %v310 = vpack.c.b16 %v297, %v296
  %v311 = vpack.c.b16 %v299, %v298
  %v312 = vpack.c.b16 %v301, %v300
  %v313 = vpack.c.b16 %v303, %v302
  %v314 = vpack.c.b16 %v305, %v304
  %v315 = vpack.c.b16 %v307, %v306
  %324 = vmatprep.subr.bf16.mxu0 0
  %325 = vmatpush1.bf16.msra.mxu0 %v308
  %326 = vmatprep.subr.bf16.mxu0 0
  %327 = vmatpush1.bf16.msra.mxu0 %v309
  %328 = vmatprep.subr.bf16.mxu0 0
  %329 = vmatpush1.bf16.msra.mxu0 %v310
  %330 = vmatprep.subr.bf16.mxu0 0
  %331 = vmatpush1.bf16.msra.mxu0 %v311
  %332 = vmatprep.subr.bf16.mxu0 0
  %333 = vmatpush1.bf16.msra.mxu0 %v312
  %334 = vmatprep.subr.bf16.mxu0 0
  %335 = vmatpush1.bf16.msra.mxu0 %v313
  %336 = vmatprep.subr.bf16.mxu0 0
  %337 = vmatpush1.bf16.msra.mxu0 %v314
  %338 = vmatprep.subr.bf16.mxu0 0
  %339 = vmatpush1.bf16.msra.mxu0 %v315
  %340 = vmatprep.subr.bf16.mxu0 0
  %341 = vmatpush1.bf16.msra.mxu0 0
  %342 = vmatprep.subr.bf16.mxu0 0
  %343 = vmatpush1.bf16.msra.mxu0 0
  %344 = vmatprep.subr.bf16.mxu0 0
  %345 = vmatpush1.bf16.msra.mxu0 0
  %346 = vmatprep.subr.bf16.mxu0 0
  %347 = vmatpush1.bf16.msra.mxu0 0
  %348 = vmatprep.subr.bf16.mxu0 0
  %349 = vmatpush1.bf16.msra.mxu0 0
  %350 = vmatprep.subr.bf16.mxu0 0
  %351 = vmatpush1.bf16.msra.mxu0 0
  %352 = vmatprep.subr.bf16.mxu0 0
  %353 = vmatpush1.bf16.msra.mxu0 0
  %354 = vmatprep.subr.bf16.mxu0 0
  %355 = vmatpush1.bf16.msra.mxu0 0
  %356 = vmatprep.mubr.bf16.mxu0 0
  %357 = vmatmul.mubr.bf16.gmra.mrb[0].mxu0 %v259
  %v358 = vpop.f32.mrb[0].mxu0
  %v359 = vadd.f32 0.0, %v358
  %v360 = vpop.f32.mrb[0].mxu0
  %v361 = vpop.f32.mrb[0].mxu0
  %v362 = vadd.f32 0.0, %v361
  %v363 = vpop.f32.mrb[0].mxu0
  %364 = vdwg.mxu0
  %v365 = vadd.f32 %v257, %v359
  %v366 = vadd.f32 %v258, %v362
  %367 = vst.msk [vmem:[#allocation4] sm:$0xff] %vm194, %v365
  %368 = vst.msk [vmem:[#allocation4 + $0x8] sm:$0xff] %vm194, %v366
  // Predicated region
  $region46: #{transformer_encoder.5} parent=0 // pred_check
    %p369 = pneg %p36
  $region47: #{transformer_encoder.5} parent=0 // pred_check_branch
    %371 = sbr.rel (%p369) target = $region49
  $region48: #{transformer_encoder.5} parent=0 // pred_region
    %v372 = vld [vmem:[#allocation2] sm:$0xff]
    %v373 = vld [vmem:[#allocation2 + $0x8] sm:$0xff]
    %v374 = vld [vmem:[#allocation4] sm:$0xff]
    %v375 = vld [vmem:[#allocation4 + $0x8] sm:$0xff]
    %v376 = vadd.f32 %v372, %v374
    %v377 = vadd.f32 %v373, %v375
    %v378 = vld [vmem:[%s9] sm:$0x1]
    %v380 = vlaneseq
    %v381 = vshrl.u32 %v380, 7
    %v382 = vsub.s32 0, %v381
    %v383 = vrot.slane %v378, %v382
    %v385 = vadd.f32 %v376, %v383
    %v386 = vadd.f32 %v377, %v383
    %387 = vst.msk [vmem:[%s10] sm:$0xff] %vm194, %v385
    %388 = vst.msk [vmem:[%s10 + $0x8] sm:$0xff] %vm194, %v386
  $region49: #{transformer_encoder.5} parent=0 // pred_fallthru
    _
  // Predicated region
  $region50: #{transformer_encoder.5} parent=0 // pred_check
    _
  $region51: #{transformer_encoder.5} parent=0 // pred_check_branch
    %390 = sbr.rel (0) target = $region53
  $region52: #{transformer_encoder.5} parent=0 // pred_region
    _
  $region53: #{transformer_encoder.5} parent=0 // pred_fallthru
    _
  // Predicated region
  $region54: #{transformer_encoder.5} parent=0 // pred_check
    _
  $region55: #{transformer_encoder.5} parent=0 // pred_check_branch
    %392 = sbr.rel (0) target = $region57
  $region56: #{transformer_encoder.5} parent=0 // pred_region
    _
  $region57: #{transformer_encoder.5} parent=0 // pred_fallthru
    _

// kernel: transformer_encoder.4
$region0: #{transformer_encoder.4}
  #allocation0 [shape = 'u32[]', space=smem, size = 0x4, offset = 0x4, fixed_abs, tag = 'smem constant byte address 0x4 - core index']
  #allocation1 [shape = 'u32[144,128]{1,0:T(1,128)}', space=vmem, size = 0x12000, scoped, tag = 'internal scratch']
  %s0 = inlined_call_operand.vmem [shape: f32[2,8,32], index: 0, kind: input, shape index: {}]
  %s1 = inlined_call_operand.vmem [shape: f32[1,32], index: 1, kind: input, shape index: {}]
  %s2 = inlined_call_operand.vmem [shape: f32[1,32], index: 2, kind: input, shape index: {}]
  %s3 = inlined_call_operand.vmem [shape: bf16[32,96], index: 3, kind: input, shape index: {}]
  %s4 = inlined_call_operand.vmem [shape: f32[1,96], index: 4, kind: input, shape index: {}]
  %s5 = inlined_call_operand.vmem [shape: bf16[2,8,32], index: 5, kind: output, shape index: {}]
  %s6 = sld [smem:[#allocation0]]
  $region53: #{transformer_encoder.4} parent=0
    _
  %s8 = ssub.s32 1, %s6
  %s9 = scalar_select 0, %s8, %s6
  loop: start=0, step=1, limit=4
  $region2: #{transformer_encoder.4} parent=0 // loop_pre_header
    _
  $region3: #{transformer_encoder.4} parent=0 // loop_header
    %s11 = sphi 0, %s15
    %p12 = scmp.ge.s32.totalorder %s11, 4
    %s18 = sphi 0, %s30
    %s19 = sphi 0, %s26
    %s20 = sphi 0, %s18
    %s21 = sphi 0, %s19
    %s22 = sphi 0, %s20
    %s23 = sphi 0, %s21
    %s33 = sphi 0, %s35
    %s36 = sphi 0, %s33
    %s37 = sphi 0, %s36
    %s53 = sphi 0, %s37
    %s57 = sphi 0, %s57
    %s59 = sphi 0, %s57
    %s60 = sphi 0, %s59
    %s74 = sphi 0, %s60
    %s78 = sphi 0, %s78
    %s80 = sphi 0, %s78
    %s81 = sphi 0, %s80
    %s95 = sphi 0, %s81
    %s101 = sphi 0, %s103
    %s104 = sphi 0, %s101
    %s105 = sphi 0, %s104
    %s121 = sphi 0, %s105
    %s127 = sphi 0, %s129
    %s130 = sphi 0, %s127
    %s131 = sphi 0, %s130
    %s147 = sphi 0, %s131
    %s155 = sphi 0, %s157
    %s158 = sphi 0, %s155
    %s159 = sphi 0, %s158
    %s175 = sphi 0, %s159
  $region4: #{transformer_encoder.4} parent=0 // loop_header_branch
    %14 = sbr.rel (%p12) target = $region8
  $region5: #{transformer_encoder.4} parent=0 // loop_body
    %s16 = ssub.s32 %s11, 1
    %s17 = ssub.s32 %s11, 2
    %s24 = sadd.s32 1, %s19
    %p25 = scmp.ge.s32.totalorder %s24, 1
    %s26 = scalar_select %p25, 0, %s24
    %s27 = sadd.s32 1, %s18
    %s28 = scalar_select %p25, %s27, %s18
    %p29 = scmp.ge.s32.totalorder %s28, 2
    %s30 = scalar_select %p29, 0, %s28
    %s31 = ssub.s32 %s18, %s30
    %p32 = scmp.eq.s32.totalorder %s31, 0
    %s34 = sadd.s32 %s33, 1
    %s35 = scalar_select %p32, %s33, %s34
    %p38 = pneg %p32
    %p39 = scmp.eq.s32.totalorder %s11, 1
    %p40 = por %p38, %p39
    %p41 = scmp.ne.s32.totalorder %s33, %s36
    %p42 = scmp.eq.s32.totalorder %s11, 0
    %p43 = por %p41, %p42
    %p44 = scmp.ne.s32.totalorder %s33, %s36
    %p45 = scmp.eq.s32.totalorder %s16, 1
    %p46 = por %p44, %p45
    %p47 = scmp.ne.s32.totalorder %s36, %s37
    %p48 = scmp.eq.s32.totalorder %s16, 0
    %p49 = por %p47, %p48
    %p50 = scmp.ne.s32.totalorder %s36, %s37
    %p51 = scmp.eq.s32.totalorder %s17, 1
    %p52 = por %p50, %p51
    %p54 = scmp.ne.s32.totalorder %s37, %s53
    %p55 = scmp.eq.s32.totalorder %s17, 0
    %p56 = por %p54, %p55
    %s58 = sadd.s32 %s57, 1
    %p61 = scmp.eq.s32.totalorder %s11, 1
    %p62 = scmp.ne.s32.totalorder %s57, %s59
    %p63 = scmp.eq.s32.totalorder %s11, 0
    %p64 = por %p62, %p63
    %p65 = scmp.ne.s32.totalorder %s57, %s59
    %p66 = scmp.eq.s32.totalorder %s16, 1
    %p67 = por %p65, %p66
    %p68 = scmp.ne.s32.totalorder %s59, %s60
    %p69 = scmp.eq.s32.totalorder %s16, 0
    %p70 = por %p68, %p69
    %p71 = scmp.ne.s32.totalorder %s59, %s60
    %p72 = scmp.eq.s32.totalorder %s17, 1
    %p73 = por %p71, %p72
    %p75 = scmp.ne.s32.totalorder %s60, %s74
    %p76 = scmp.eq.s32.totalorder %s17, 0
    %p77 = por %p75, %p76
    %s79 = sadd.s32 %s78, 1
    %p82 = scmp.eq.s32.totalorder %s11, 1
    %p83 = scmp.ne.s32.totalorder %s78, %s80
    %p84 = scmp.eq.s32.totalorder %s11, 0
    %p85 = por %p83, %p84
    %p86 = scmp.ne.s32.totalorder %s78, %s80
    %p87 = scmp.eq.s32.totalorder %s16, 1
    %p88 = por %p86, %p87
    %p89 = scmp.ne.s32.totalorder %s80, %s81
    %p90 = scmp.eq.s32.totalorder %s16, 0
    %p91 = por %p89, %p90
    %p92 = scmp.ne.s32.totalorder %s80, %s81
    %p93 = scmp.eq.s32.totalorder %s17, 1
    %p94 = por %p92, %p93
    %p96 = scmp.ne.s32.totalorder %s81, %s95
    %p97 = scmp.eq.s32.totalorder %s17, 0
    %p98 = por %p96, %p97
    %s99 = ssub.s32 %s19, %s26
    %p100 = scmp.eq.s32.totalorder %s99, 0
    %s102 = sadd.s32 %s101, 1
    %s103 = scalar_select %p100, %s101, %s102
    %p106 = pneg %p100
    %p107 = scmp.eq.s32.totalorder %s11, 1
    %p108 = por %p106, %p107
    %p109 = scmp.ne.s32.totalorder %s101, %s104
    %p110 = scmp.eq.s32.totalorder %s11, 0
    %p111 = por %p109, %p110
    %p112 = scmp.ne.s32.totalorder %s101, %s104
    %p113 = scmp.eq.s32.totalorder %s16, 1
    %p114 = por %p112, %p113
    %p115 = scmp.ne.s32.totalorder %s104, %s105
    %p116 = scmp.eq.s32.totalorder %s16, 0
    %p117 = por %p115, %p116
    %p118 = scmp.ne.s32.totalorder %s104, %s105
    %p119 = scmp.eq.s32.totalorder %s17, 1
    %p120 = por %p118, %p119
    %p122 = scmp.ne.s32.totalorder %s105, %s121
    %p123 = scmp.eq.s32.totalorder %s17, 0
    %p124 = por %p122, %p123
    %s125 = ssub.s32 %s19, %s26
    %p126 = scmp.eq.s32.totalorder %s125, 0
    %s128 = sadd.s32 %s127, 1
    %s129 = scalar_select %p126, %s127, %s128
    %p132 = pneg %p126
    %p133 = scmp.eq.s32.totalorder %s11, 1
    %p134 = por %p132, %p133
    %p135 = scmp.ne.s32.totalorder %s127, %s130
    %p136 = scmp.eq.s32.totalorder %s11, 0
    %p137 = por %p135, %p136
    %p138 = scmp.ne.s32.totalorder %s127, %s130
    %p139 = scmp.eq.s32.totalorder %s16, 1
    %p140 = por %p138, %p139
    %p141 = scmp.ne.s32.totalorder %s130, %s131
    %p142 = scmp.eq.s32.totalorder %s16, 0
    %p143 = por %p141, %p142
    %p144 = scmp.ne.s32.totalorder %s130, %s131
    %p145 = scmp.eq.s32.totalorder %s17, 1
    %p146 = por %p144, %p145
    %p148 = scmp.ne.s32.totalorder %s131, %s147
    %p149 = scmp.eq.s32.totalorder %s17, 0
    %p150 = por %p148, %p149
    %s151 = ssub.s32 %s18, %s30
    %s152 = ssub.s32 %s19, %s26
    %s153 = sor.u32 %s151, %s152
    %p154 = scmp.eq.s32.totalorder %s153, 0
    %s156 = sadd.s32 %s155, 1
    %s157 = scalar_select %p154, %s155, %s156
    %p160 = pneg %p154
    %p161 = scmp.eq.s32.totalorder %s11, 1
    %p162 = por %p160, %p161
    %p163 = scmp.ne.s32.totalorder %s155, %s158
    %p164 = scmp.eq.s32.totalorder %s11, 0
    %p165 = por %p163, %p164
    %p166 = scmp.ne.s32.totalorder %s155, %s158
    %p167 = scmp.eq.s32.totalorder %s16, 1
    %p168 = por %p166, %p167
    %p169 = scmp.ne.s32.totalorder %s158, %s159
    %p170 = scmp.eq.s32.totalorder %s16, 0
    %p171 = por %p169, %p170
    %p172 = scmp.ne.s32.totalorder %s158, %s159
    %p173 = scmp.eq.s32.totalorder %s17, 1
    %p174 = por %p172, %p173
    %p176 = scmp.ne.s32.totalorder %s159, %s175
    %p177 = scmp.eq.s32.totalorder %s17, 0
    %p178 = por %p176, %p177
    %p179 = scmp.le.s32.totalorder 1, %s11
    %p180 = scmp.lt.s32.totalorder %s11, 3
    %p181 = pnand %p179, %p180
    %p182 = pneg %p181
    // Predicated region
    $region9: #{transformer_encoder.4} parent=5 // pred_check
      _
    $region10: #{transformer_encoder.4} parent=5 // pred_check_branch
      %184 = sbr.rel (%p181) target = $region12
    $region11: #{transformer_encoder.4} parent=5 // pred_region
      %s185 = ssub.s32 %s11, 1
      // Predicated region
      $region13: #{transformer_encoder.4} parent=11 // pred_check
        %p186 = pneg %p70
      $region14: #{transformer_encoder.4} parent=11 // pred_check_branch
        %188 = sbr.rel (%p186) target = $region16
      $region15: #{transformer_encoder.4} parent=11 // pred_region
        _
      $region16: #{transformer_encoder.4} parent=11 // pred_fallthru
        _
      // Predicated region
      $region17: #{transformer_encoder.4} parent=11 // pred_check
        %p189 = pneg %p91
      $region18: #{transformer_encoder.4} parent=11 // pred_check_branch
        %191 = sbr.rel (%p189) target = $region20
      $region19: #{transformer_encoder.4} parent=11 // pred_region
        _
      $region20: #{transformer_encoder.4} parent=11 // pred_fallthru
        _
      // Predicated region
      $region21: #{transformer_encoder.4} parent=11 // pred_check
        %p192 = pneg %p117
      $region22: #{transformer_encoder.4} parent=11 // pred_check_branch
        %194 = sbr.rel (%p192) target = $region24
      $region23: #{transformer_encoder.4} parent=11 // pred_region
        %p195 = scmp.lt.s32.totalorder %s21, 0
        %s196 = scalar_select %p195, %s21, 0
        %s197 = smul.addr %s196, 4
        %s198 = scalar_lea.vmem %s3, %s197
      $region24: #{transformer_encoder.4} parent=11 // pred_fallthru
        _
      // Predicated region
      $region25: #{transformer_encoder.4} parent=11 // pred_check
        %p199 = pneg %p143
      $region26: #{transformer_encoder.4} parent=11 // pred_check_branch
        %201 = sbr.rel (%p199) target = $region28
      $region27: #{transformer_encoder.4} parent=11 // pred_region
        %p202 = scmp.lt.s32.totalorder %s21, 0
        %s203 = scalar_select %p202, %s21, 0
        %s204 = scalar_lea.vmem %s4, %s203
      $region28: #{transformer_encoder.4} parent=11 // pred_fallthru
        _
    $region12: #{transformer_encoder.4} parent=5 // pred_fallthru
      _
    %p205 = scmp.lt.s32.totalorder %s11, 2
    // Predicated region
    $region29: #{transformer_encoder.4} parent=5 // pred_check
      %p206 = pneg %p205
    $region30: #{transformer_encoder.4} parent=5 // pred_check_branch
      %208 = sbr.rel (%p206) target = $region32
    $region31: #{transformer_encoder.4} parent=5 // pred_region
      // Predicated region
      $region33: #{transformer_encoder.4} parent=31 // pred_check
        %p209 = pneg %p43
      $region34: #{transformer_encoder.4} parent=31 // pred_check_branch
        %211 = sbr.rel (%p209) target = $region36
      $region35: #{transformer_encoder.4} parent=31 // pred_region
        %p212 = scmp.lt.s32.totalorder %s18, 1
        %s213 = scalar_select %p212, %s18, 1
        %s214 = smul.addr %s213, 8
        %s215 = scalar_lea.vmem %s0, %s214
      $region36: #{transformer_encoder.4} parent=31 // pred_fallthru
        _
    $region32: #{transformer_encoder.4} parent=5 // pred_fallthru
      _
    %p216 = scmp.le.s32.totalorder 1, %s11
    %p217 = scmp.lt.s32.totalorder %s11, 3
    %p218 = pnand %p216, %p217
    %p219 = pneg %p218
    // Predicated region
    $region37: #{transformer_encoder.4} parent=5 // pred_check
      _
    $region38: #{transformer_encoder.4} parent=5 // pred_check_branch
      %221 = sbr.rel (%p218) target = $region40
    $region39: #{transformer_encoder.4} parent=5 // pred_region
      %s222 = ssub.s32 %s11, 1
      %p223 = scmp.lt.s32.totalorder %s20, 1
      %s224 = scalar_select %p223, %s20, 1
      %s225 = smul.addr %s224, 8
      %s226 = scalar_lea.vmem %s0, %s225
      %p227 = pneg %p49
      %p228 = pneg %p46
      %p229 = pneg %p70
      %p230 = pneg %p67
      %p231 = pneg %p91
      %p232 = pneg %p88
      %p233 = scmp.lt.s32.totalorder %s21, 0
      %s234 = scalar_select %p233, %s21, 0
      %s235 = smul.addr %s234, 4
      %s236 = scalar_lea.vmem %s3, %s235
      %p237 = pneg %p117
      %p238 = pneg %p114
      %p239 = scmp.lt.s32.totalorder %s21, 0
      %s240 = scalar_select %p239, %s21, 0
      %s241 = scalar_lea.vmem %s4, %s240
      %p242 = pneg %p143
      %p243 = pneg %p140
      %p244 = pneg %p171
      %p245 = pneg %p168
      %p246 = scmp.lt.s32.totalorder %s20, 1
      %s247 = scalar_select %p246, %s20, 1
      %p248 = scmp.lt.s32.totalorder %s21, 0
      %s249 = scalar_select %p248, %s21, 0
      %s250 = sadd.s32 %s249, %s247
      %s251 = smul.addr %s250, 4
      %s252 = scalar_lea.vmem %s5, %s251
      %p253 = scmp.lt.s32.totalorder %s20, 1
      %s254 = scalar_select %p253, %s20, 1
      %s255 = smul.addr %s254, 8
      %s256 = scalar_lea.vmem %s0, %s255
      %p257 = scmp.lt.s32.totalorder %s21, 0
      %s258 = scalar_select %p257, %s21, 0
      %s259 = smul.addr %s258, 4
      %s260 = scalar_lea.vmem %s3, %s259
      %p261 = scmp.lt.s32.totalorder %s21, 0
      %s262 = scalar_select %p261, %s21, 0
      %s263 = scalar_lea.vmem %s4, %s262
      %p264 = scmp.lt.s32.totalorder %s20, 1
      %s265 = scalar_select %p264, %s20, 1
      %p266 = scmp.lt.s32.totalorder %s21, 0
      %s267 = scalar_select %p266, %s21, 0
      %s268 = sadd.s32 %s267, %s265
      %s269 = smul.addr %s268, 4
      %s270 = scalar_lea.vmem %s5, %s269
      %v272 = vld [vmem:[%s256] sm:$0xff]
      %v273 = vld [vmem:[%s1] sm:$0x1]
      %v274 = vld [vmem:[%s2] sm:$0x1]
      %vm275 = vcmask 261120
      %v276 = vsel %vm275, %v272, 0.0
      %277 = vadd.xlane.f32.xlu0 %v276
      %v278 = vpop.xlane.xlu0 %277
      %v279 = vrcp.pop 32.0
      %v280 = vmul.f32 %v278, %v279
      %v281 = vsub.f32 %v272, %v280
      %v282 = vmul.f32 %v281, %v281
      %v283 = vsel %vm275, %v282, 0.0
      %284 = vadd.xlane.f32.xlu0 %v283
      %v285 = vpop.xlane.xlu0 %284
      %v286 = vmul.f32 %v285, %v279
      %v287 = vadd.f32 %v286, 1e-05
      %v288 = vrsqrt.pop %v287
      %v289 = vmul.f32 %v281, %v288
      %v291 = vlaneseq
      %v292 = vshrl.u32 %v291, 7
      %v293 = vsub.s32 0, %v292
      %v294 = vrot.slane %v273, %v293
      %v296 = vmul.f32 %v289, %v294
      %v298 = vlaneseq
      %v299 = vshrl.u32 %v298, 7
      %v300 = vsub.s32 0, %v299
      %v301 = vrot.slane %v274, %v300
      %v303 = vadd.f32 %v296, %v301
      %v304 = vpack.c.bf16 %v303, %v303
      %v305 = vld [vmem:[%s260] sm:$0xf]
      %v306 = vld [vmem:[%s260 + $0x4] sm:$0xf]
      %v307 = vld [vmem:[%s260 + $0x8] sm:$0xf]
      %v308 = vld [vmem:[%s260 + $0xc] sm:$0xf]
      %v309 = vld [vmem:[%s263] sm:$0x1]
      %v311 = vlaneseq
      %v312 = vshrl.u32 %v311, 7
      %v313 = vsub.s32 0, %v312
      %v314 = vrot.slane %v309, %v313
      %v320 = vunpack.c.l.b16 %v305
      %v321 = vunpack.c.l.b16 %v306
      %v322 = vunpack.c.l.b16 %v307
      %v323 = vunpack.c.l.b16 %v308
      %v324 = vpack.c.b16 %v321, %v320
      %v325 = vpack.c.b16 %v323, %v322
      %v329 = vsel %vm275, %v304, 0
      %331 = vmatprep.subr.bf16.mxu0 0
      %332 = vmatpush1.bf16.msra.mxu0 %v324
      %333 = vmatprep.subr.bf16.mxu0 0
      %334 = vmatpush1.bf16.msra.mxu0 %v325
      %335 = vmatprep.subr.bf16.mxu0 0
      %336 = vmatpush1.bf16.msra.mxu0 0
      %337 = vmatprep.subr.bf16.mxu0 0
      %338 = vmatpush1.bf16.msra.mxu0 0
      %339 = vmatprep.subr.bf16.mxu0 0
      %340 = vmatpush1.bf16.msra.mxu0 0
      %341 = vmatprep.subr.bf16.mxu0 0
      %342 = vmatpush1.bf16.msra.mxu0 0
      %343 = vmatprep.subr.bf16.mxu0 0
      %344 = vmatpush1.bf16.msra.mxu0 0
      %345 = vmatprep.subr.bf16.mxu0 0
      %346 = vmatpush1.bf16.msra.mxu0 0
      %347 = vmatprep.subr.bf16.mxu0 0
      %348 = vmatpush1.bf16.msra.mxu0 0
      %349 = vmatprep.subr.bf16.mxu0 0
      %350 = vmatpush1.bf16.msra.mxu0 0
      %351 = vmatprep.subr.bf16.mxu0 0
      %352 = vmatpush1.bf16.msra.mxu0 0
      %353 = vmatprep.subr.bf16.mxu0 0
      %354 = vmatpush1.bf16.msra.mxu0 0
      %355 = vmatprep.subr.bf16.mxu0 0
      %356 = vmatpush1.bf16.msra.mxu0 0
      %357 = vmatprep.subr.bf16.mxu0 0
      %358 = vmatpush1.bf16.msra.mxu0 0
      %359 = vmatprep.subr.bf16.mxu0 0
      %360 = vmatpush1.bf16.msra.mxu0 0
      %361 = vmatprep.subr.bf16.mxu0 0
      %362 = vmatpush1.bf16.msra.mxu0 0
      %363 = vmatprep.mubr.bf16.mxu0 0
      %364 = vmatmul.mubr.bf16.gmra.mrb[0].mxu0 %v329
      %v365 = vpop.f32.mrb[0].mxu0
      %v366 = vadd.f32 %v314, %v365
      %v367 = vpop.f32.mrb[0].mxu0
      %v368 = vpop.f32.mrb[0].mxu0
      %v369 = vpop.f32.mrb[0].mxu0
      %370 = vdwg.mxu0
      %v371 = vmul.f32 %v366, 0.35355338
      %v372 = vpack.c.bf16 %v371, %v371
      %v373 = vpack.c.bf16 %v366, %v366
      %375 = vrot.lane.b32.xlu0 %v372, 120
      %v376 = vpop.permute.xlu0 %375
      %377 = vrot.lane.b32.xlu0 %v372, 112
      %v378 = vpop.permute.xlu0 %377
      %379 = vrot.lane.b32.xlu0 %v372, 104
      %v380 = vpop.permute.xlu0 %379
      %v382 = vunpack.c.l.s4 1983009808
      %v383 = vunpack.c.0.s8 %v382
      %v384 = vlaneseq
      %v385 = vshrl.u32 %v384, 7
      %v386 = vsub.s32 %v383, %v385
      %v387 = vrot.slane %v372, %v386
      %v390 = vunpack.c.l.s4 1983009808
      %v391 = vunpack.c.0.s8 %v390
      %v392 = vlaneseq
      %v393 = vshrl.u32 %v392, 7
      %v394 = vsub.s32 %v391, %v393
      %v395 = vrot.slane %v378, %v394
      %v396 = vcombine.low %v387, %v395
      %v397 = vcombine.high %v387, %v395
      %v399 = vunpack.c.l.s4 1934713408
      %v400 = vunpack.c.0.s8 %v399
      %v401 = vlaneseq
      %v402 = vshrl.u32 %v401, 7
      %v403 = vsub.s32 %v400, %v402
      %v404 = vrot.slane %v396, %v403
      %v406 = vunpack.c.l.s4 1934713408
      %v407 = vunpack.c.0.s8 %v406
      %v408 = vlaneseq
      %v409 = vshrl.u32 %v408, 7
      %v410 = vsub.s32 %v407, %v409
      %v411 = vrot.slane %v397, %v410
      %v412 = vcombine.high %v404, 0
      %v413 = vcombine.high %v411, 0
      %v416 = vunpack.c.l.s4 1983009808
      %v417 = vunpack.c.0.s8 %v416
      %v418 = vlaneseq
      %v419 = vshrl.u32 %v418, 7
      %v420 = vsub.s32 %v417, %v419
      %v421 = vrot.slane %v376, %v420
      %v424 = vunpack.c.l.s4 1983009808
      %v425 = vunpack.c.0.s8 %v424
      %v426 = vlaneseq
      %v427 = vshrl.u32 %v426, 7
      %v428 = vsub.s32 %v425, %v427
      %v429 = vrot.slane %v380, %v428
      %v430 = vcombine.low %v421, %v429
      %v431 = vcombine.high %v421, %v429
      %v433 = vunpack.c.l.s4 1934713408
      %v434 = vunpack.c.0.s8 %v433
      %v435 = vlaneseq
      %v436 = vshrl.u32 %v435, 7
      %v437 = vsub.s32 %v434, %v436
      %v438 = vrot.slane %v430, %v437
      %v440 = vunpack.c.l.s4 1934713408
      %v441 = vunpack.c.0.s8 %v440
      %v442 = vlaneseq
      %v443 = vshrl.u32 %v442, 7
      %v444 = vsub.s32 %v441, %v443
      %v445 = vrot.slane %v431, %v444
      %v446 = vcombine.high %v438, 0
      %v447 = vcombine.high %v445, 0
      %v450 = vpack.i.b16 %v438, %v404
      %v452 = vshrl.u32 %v404, 16
      %v453 = vshrl.u32 %v438, 16
      %v454 = vpack.i.b16 %v453, %v452
      %v458 = vpack.i.b16 %v446, %v412
      %v460 = vshrl.u32 %v412, 16
      %v461 = vshrl.u32 %v446, 16
      %v462 = vpack.i.b16 %v461, %v460
      %v466 = vpack.i.b16 %v445, %v411
      %v468 = vshrl.u32 %v411, 16
      %v469 = vshrl.u32 %v445, 16
      %v470 = vpack.i.b16 %v469, %v468
      %v474 = vpack.i.b16 %v447, %v413
      %v476 = vshrl.u32 %v413, 16
      %v477 = vshrl.u32 %v447, 16
      %v478 = vpack.i.b16 %v477, %v476
      %v480 = vcombine.low %v450, %v466
      %v482 = vunpack.c.l.s4 1983009808
      %v483 = vunpack.c.0.s8 %v482
      %v484 = vlaneseq
      %v485 = vshrl.u32 %v484, 7
      %v486 = vsub.s32 %v483, %v485
      %v487 = vrot.slane %v480, %v486
      %v488 = vcombine.low %v458, %v474
      %v490 = vunpack.c.l.s4 1983009808
      %v491 = vunpack.c.0.s8 %v490
      %v492 = vlaneseq
      %v493 = vshrl.u32 %v492, 7
      %v494 = vsub.s32 %v491, %v493
      %v495 = vrot.slane %v488, %v494
      %v496 = vcombine.low %v487, %v495
      %v498 = vunpack.c.l.s4 1934713408
      %v499 = vunpack.c.0.s8 %v498
      %v500 = vlaneseq
      %v501 = vshrl.u32 %v500, 7
      %v502 = vsub.s32 %v499, %v501
      %v503 = vrot.slane %v496, %v502
      %v504 = vcombine.high %v503, 0
      %v505 = vcombine.low %v454, %v470
      %v507 = vunpack.c.l.s4 1983009808
      %v508 = vunpack.c.0.s8 %v507
      %v509 = vlaneseq
      %v510 = vshrl.u32 %v509, 7
      %v511 = vsub.s32 %v508, %v510
      %v512 = vrot.slane %v505, %v511
      %v513 = vcombine.low %v462, %v478
      %v515 = vunpack.c.l.s4 1983009808
      %v516 = vunpack.c.0.s8 %v515
      %v517 = vlaneseq
      %v518 = vshrl.u32 %v517, 7
      %v519 = vsub.s32 %v516, %v518
      %v520 = vrot.slane %v513, %v519
      %v521 = vcombine.low %v512, %v520
      %v523 = vunpack.c.l.s4 1934713408
      %v524 = vunpack.c.0.s8 %v523
      %v525 = vlaneseq
      %v526 = vshrl.u32 %v525, 7
      %v527 = vsub.s32 %v524, %v526
      %v528 = vrot.slane %v521, %v527
      %v529 = vcombine.high %v528, 0
      %v532 = vpack.i.b16 %v528, %v503
      %v533 = vshrl.u32 %v503, 16
      %v534 = vshrl.u32 %v528, 16
      %v535 = vpack.i.b16 %v534, %v533
      %v538 = vpack.i.b16 %v529, %v504
      %v539 = vshrl.u32 %v504, 16
      %v540 = vshrl.u32 %v529, 16
      %v541 = vpack.i.b16 %v540, %v539
      %543 = vrot.lane.b32.xlu0 %v373, 120
      %v544 = vpop.permute.xlu0 %543
      %545 = vrot.lane.b32.xlu0 %v373, 112
      %v546 = vpop.permute.xlu0 %545
      %547 = vrot.lane.b32.xlu0 %v373, 104
      %v548 = vpop.permute.xlu0 %547
      %549 = vrot.lane.b32.xlu0 %v373, 96
      %v550 = vpop.permute.xlu0 %549
      %551 = vrot.lane.b32.xlu0 %v544, 96
      %v552 = vpop.permute.xlu0 %551
      %553 = vrot.lane.b32.xlu0 %v546, 96
      %v554 = vpop.permute.xlu0 %553
      %555 = vrot.lane.b32.xlu0 %v548, 96
      %v556 = vpop.permute.xlu0 %555
      %v559 = vunpack.c.l.s4 1983009808
      %v560 = vunpack.c.0.s8 %v559
      %v561 = vlaneseq
      %v562 = vshrl.u32 %v561, 7
      %v563 = vsub.s32 %v560, %v562
      %v564 = vrot.slane %v550, %v563
      %v567 = vunpack.c.l.s4 1983009808
      %v568 = vunpack.c.0.s8 %v567
      %v569 = vlaneseq
      %v570 = vshrl.u32 %v569, 7
      %v571 = vsub.s32 %v568, %v570
      %v572 = vrot.slane %v554, %v571
      %v573 = vcombine.low %v564, %v572
      %v574 = vcombine.high %v564, %v572
      %v576 = vunpack.c.l.s4 1934713408
      %v577 = vunpack.c.0.s8 %v576
      %v578 = vlaneseq
      %v579 = vshrl.u32 %v578, 7
      %v580 = vsub.s32 %v577, %v579
      %v581 = vrot.slane %v573, %v580
      %v583 = vunpack.c.l.s4 1934713408
      %v584 = vunpack.c.0.s8 %v583
      %v585 = vlaneseq
      %v586 = vshrl.u32 %v585, 7
      %v587 = vsub.s32 %v584, %v586
      %v588 = vrot.slane %v574, %v587
      %v589 = vcombine.high %v581, 0
      %v590 = vcombine.high %v588, 0
      %v593 = vunpack.c.l.s4 1983009808
      %v594 = vunpack.c.0.s8 %v593
      %v595 = vlaneseq
      %v596 = vshrl.u32 %v595, 7
      %v597 = vsub.s32 %v594, %v596
      %v598 = vrot.slane %v552, %v597
      %v601 = vunpack.c.l.s4 1983009808
      %v602 = vunpack.c.0.s8 %v601
      %v603 = vlaneseq
      %v604 = vshrl.u32 %v603, 7
      %v605 = vsub.s32 %v602, %v604
      %v606 = vrot.slane %v556, %v605
      %v607 = vcombine.low %v598, %v606
      %v608 = vcombine.high %v598, %v606
      %v610 = vunpack.c.l.s4 1934713408
      %v611 = vunpack.c.0.s8 %v610
      %v612 = vlaneseq
      %v613 = vshrl.u32 %v612, 7
      %v614 = vsub.s32 %v611, %v613
      %v615 = vrot.slane %v607, %v614
      %v617 = vunpack.c.l.s4 1934713408
      %v618 = vunpack.c.0.s8 %v617
      %v619 = vlaneseq
      %v620 = vshrl.u32 %v619, 7
      %v621 = vsub.s32 %v618, %v620
      %v622 = vrot.slane %v608, %v621
      %v623 = vcombine.high %v615, 0
      %v624 = vcombine.high %v622, 0
      %v627 = vpack.i.b16 %v615, %v581
      %v629 = vshrl.u32 %v581, 16
      %v630 = vshrl.u32 %v615, 16
      %v631 = vpack.i.b16 %v630, %v629
      %v635 = vpack.i.b16 %v623, %v589
      %v637 = vshrl.u32 %v589, 16
      %v638 = vshrl.u32 %v623, 16
      %v639 = vpack.i.b16 %v638, %v637
      %v643 = vpack.i.b16 %v622, %v588
      %v645 = vshrl.u32 %v588, 16
      %v646 = vshrl.u32 %v622, 16
      %v647 = vpack.i.b16 %v646, %v645
      %v651 = vpack.i.b16 %v624, %v590
      %v653 = vshrl.u32 %v590, 16
      %v654 = vshrl.u32 %v624, 16
      %v655 = vpack.i.b16 %v654, %v653
      %v657 = vcombine.low %v627, %v643
      %v659 = vunpack.c.l.s4 1983009808
      %v660 = vunpack.c.0.s8 %v659
      %v661 = vlaneseq
      %v662 = vshrl.u32 %v661, 7
      %v663 = vsub.s32 %v660, %v662
      %v664 = vrot.slane %v657, %v663
      %v665 = vcombine.low %v635, %v651
      %v667 = vunpack.c.l.s4 1983009808
      %v668 = vunpack.c.0.s8 %v667
      %v669 = vlaneseq
      %v670 = vshrl.u32 %v669, 7
      %v671 = vsub.s32 %v668, %v670
      %v672 = vrot.slane %v665, %v671
      %v673 = vcombine.low %v664, %v672
      %v675 = vunpack.c.l.s4 1934713408
      %v676 = vunpack.c.0.s8 %v675
      %v677 = vlaneseq
      %v678 = vshrl.u32 %v677, 7
      %v679 = vsub.s32 %v676, %v678
      %v680 = vrot.slane %v673, %v679
      %v681 = vcombine.high %v680, 0
      %v682 = vcombine.low %v631, %v647
      %v684 = vunpack.c.l.s4 1983009808
      %v685 = vunpack.c.0.s8 %v684
      %v686 = vlaneseq
      %v687 = vshrl.u32 %v686, 7
      %v688 = vsub.s32 %v685, %v687
      %v689 = vrot.slane %v682, %v688
      %v690 = vcombine.low %v639, %v655
      %v692 = vunpack.c.l.s4 1983009808
      %v693 = vunpack.c.0.s8 %v692
      %v694 = vlaneseq
      %v695 = vshrl.u32 %v694, 7
      %v696 = vsub.s32 %v693, %v695
      %v697 = vrot.slane %v690, %v696
      %v698 = vcombine.low %v689, %v697
      %v700 = vunpack.c.l.s4 1934713408
      %v701 = vunpack.c.0.s8 %v700
      %v702 = vlaneseq
      %v703 = vshrl.u32 %v702, 7
      %v704 = vsub.s32 %v701, %v703
      %v705 = vrot.slane %v698, %v704
      %v706 = vcombine.high %v705, 0
      %v709 = vpack.i.b16 %v705, %v680
      %v710 = vshrl.u32 %v680, 16
      %v711 = vshrl.u32 %v705, 16
      %v712 = vpack.i.b16 %v711, %v710
      %v715 = vpack.i.b16 %v706, %v681
      %v716 = vshrl.u32 %v681, 16
      %v717 = vshrl.u32 %v706, 16
      %v718 = vpack.i.b16 %v717, %v716
      %719 = vrot.lane.b32.xlu0 %v373, 64
      %v720 = vpop.permute.xlu0 %719
      %721 = vrot.lane.b32.xlu0 %v544, 64
      %v722 = vpop.permute.xlu0 %721
      %723 = vrot.lane.b32.xlu0 %v546, 64
      %v724 = vpop.permute.xlu0 %723
      %725 = vrot.lane.b32.xlu0 %v548, 64
      %v726 = vpop.permute.xlu0 %725
      %v729 = vunpack.c.l.s4 1983009808
      %v730 = vunpack.c.0.s8 %v729
      %v731 = vlaneseq
      %v732 = vshrl.u32 %v731, 7
      %v733 = vsub.s32 %v730, %v732
      %v734 = vrot.slane %v720, %v733
      %v737 = vunpack.c.l.s4 1983009808
      %v738 = vunpack.c.0.s8 %v737
      %v739 = vlaneseq
      %v740 = vshrl.u32 %v739, 7
      %v741 = vsub.s32 %v738, %v740
      %v742 = vrot.slane %v724, %v741
      %v743 = vcombine.low %v734, %v742
      %v744 = vcombine.high %v734, %v742
      %v746 = vunpack.c.l.s4 1934713408
      %v747 = vunpack.c.0.s8 %v746
      %v748 = vlaneseq
      %v749 = vshrl.u32 %v748, 7
      %v750 = vsub.s32 %v747, %v749
      %v751 = vrot.slane %v743, %v750
      %v753 = vunpack.c.l.s4 1934713408
      %v754 = vunpack.c.0.s8 %v753
      %v755 = vlaneseq
      %v756 = vshrl.u32 %v755, 7
      %v757 = vsub.s32 %v754, %v756
      %v758 = vrot.slane %v744, %v757
      %v759 = vcombine.high %v751, 0
      %v760 = vcombine.high %v758, 0
      %v763 = vunpack.c.l.s4 1983009808
      %v764 = vunpack.c.0.s8 %v763
      %v765 = vlaneseq
      %v766 = vshrl.u32 %v765, 7
      %v767 = vsub.s32 %v764, %v766
      %v768 = vrot.slane %v722, %v767
      %v771 = vunpack.c.l.s4 1983009808
      %v772 = vunpack.c.0.s8 %v771
      %v773 = vlaneseq
      %v774 = vshrl.u32 %v773, 7
      %v775 = vsub.s32 %v772, %v774
      %v776 = vrot.slane %v726, %v775
      %v777 = vcombine.low %v768, %v776
      %v778 = vcombine.high %v768, %v776
      %v780 = vunpack.c.l.s4 1934713408
      %v781 = vunpack.c.0.s8 %v780
      %v782 = vlaneseq
      %v783 = vshrl.u32 %v782, 7
      %v784 = vsub.s32 %v781, %v783
      %v785 = vrot.slane %v777, %v784
      %v787 = vunpack.c.l.s4 1934713408
      %v788 = vunpack.c.0.s8 %v787
      %v789 = vlaneseq
      %v790 = vshrl.u32 %v789, 7
      %v791 = vsub.s32 %v788, %v790
      %v792 = vrot.slane %v778, %v791
      %v793 = vcombine.high %v785, 0
      %v794 = vcombine.high %v792, 0
      %v797 = vpack.i.b16 %v785, %v751
      %v799 = vshrl.u32 %v751, 16
      %v800 = vshrl.u32 %v785, 16
      %v801 = vpack.i.b16 %v800, %v799
      %v805 = vpack.i.b16 %v793, %v759
      %v807 = vshrl.u32 %v759, 16
      %v808 = vshrl.u32 %v793, 16
      %v809 = vpack.i.b16 %v808, %v807
      %v813 = vpack.i.b16 %v792, %v758
      %v815 = vshrl.u32 %v758, 16
      %v816 = vshrl.u32 %v792, 16
      %v817 = vpack.i.b16 %v816, %v815
      %v821 = vpack.i.b16 %v794, %v760
      %v823 = vshrl.u32 %v760, 16
      %v824 = vshrl.u32 %v794, 16
      %v825 = vpack.i.b16 %v824, %v823
      %v827 = vcombine.low %v797, %v813
      %v829 = vunpack.c.l.s4 1983009808
      %v830 = vunpack.c.0.s8 %v829
      %v831 = vlaneseq
      %v832 = vshrl.u32 %v831, 7
      %v833 = vsub.s32 %v830, %v832
      %v834 = vrot.slane %v827, %v833
      %v835 = vcombine.low %v805, %v821
      %v837 = vunpack.c.l.s4 1983009808
      %v838 = vunpack.c.0.s8 %v837
      %v839 = vlaneseq
      %v840 = vshrl.u32 %v839, 7
      %v841 = vsub.s32 %v838, %v840
      %v842 = vrot.slane %v835, %v841
      %v843 = vcombine.low %v834, %v842
      %v845 = vunpack.c.l.s4 1934713408
      %v846 = vunpack.c.0.s8 %v845
      %v847 = vlaneseq
      %v848 = vshrl.u32 %v847, 7
      %v849 = vsub.s32 %v846, %v848
      %v850 = vrot.slane %v843, %v849
      %v851 = vcombine.high %v850, 0
      %v852 = vcombine.low %v801, %v817
      %v854 = vunpack.c.l.s4 1983009808
      %v855 = vunpack.c.0.s8 %v854
      %v856 = vlaneseq
      %v857 = vshrl.u32 %v856, 7
      %v858 = vsub.s32 %v855, %v857
      %v859 = vrot.slane %v852, %v858
      %v860 = vcombine.low %v809, %v825
      %v862 = vunpack.c.l.s4 1983009808
      %v863 = vunpack.c.0.s8 %v862
      %v864 = vlaneseq
      %v865 = vshrl.u32 %v864, 7
      %v866 = vsub.s32 %v863, %v865
      %v867 = vrot.slane %v860, %v866
      %v868 = vcombine.low %v859, %v867
      %v870 = vunpack.c.l.s4 1934713408
      %v871 = vunpack.c.0.s8 %v870
      %v872 = vlaneseq
      %v873 = vshrl.u32 %v872, 7
      %v874 = vsub.s32 %v871, %v873
      %v875 = vrot.slane %v868, %v874
      %v876 = vcombine.high %v875, 0
      %v879 = vpack.i.b16 %v875, %v850
      %v880 = vshrl.u32 %v850, 16
      %v881 = vshrl.u32 %v875, 16
      %v882 = vpack.i.b16 %v881, %v880
      %v885 = vpack.i.b16 %v876, %v851
      %v886 = vshrl.u32 %v851, 16
      %v887 = vshrl.u32 %v876, 16
      %v888 = vpack.i.b16 %v887, %v886
      %vm889 = vcmask 64512
      %v891 = vsel %vm889, %v532, 0
      %v894 = vsel %vm889, %v709, 0
      %896 = vmatprep.subr.bf16.mxu0 0
      %897 = vmatpush1.bf16.xpose.msra.mxu0 %v894
      %898 = vmatprep.subr.bf16.mxu0 0
      %899 = vmatpush1.bf16.xpose.msra.mxu0 0
      %900 = vmatprep.subr.bf16.mxu0 0
      %901 = vmatpush1.bf16.xpose.msra.mxu0 0
      %902 = vmatprep.subr.bf16.mxu0 0
      %903 = vmatpush1.bf16.xpose.msra.mxu0 0
      %904 = vmatprep.subr.bf16.mxu0 0
      %905 = vmatpush1.bf16.xpose.msra.mxu0 0
      %906 = vmatprep.subr.bf16.mxu0 0
      %907 = vmatpush1.bf16.xpose.msra.mxu0 0
      %908 = vmatprep.subr.bf16.mxu0 0
      %909 = vmatpush1.bf16.xpose.msra.mxu0 0
      %910 = vmatprep.subr.bf16.mxu0 0
      %911 = vmatpush1.bf16.xpose.msra.mxu0 0
      %912 = vmatprep.subr.bf16.mxu0 0
      %913 = vmatpush1.bf16.xpose.msra.mxu0 0
      %914 = vmatprep.subr.bf16.mxu0 0
      %915 = vmatpush1.bf16.xpose.msra.mxu0 0
      %916 = vmatprep.subr.bf16.mxu0 0
      %917 = vmatpush1.bf16.xpose.msra.mxu0 0
      %918 = vmatprep.subr.bf16.mxu0 0
      %919 = vmatpush1.bf16.xpose.msra.mxu0 0
      %920 = vmatprep.subr.bf16.mxu0 0
      %921 = vmatpush1.bf16.xpose.msra.mxu0 0
      %922 = vmatprep.subr.bf16.mxu0 0
      %923 = vmatpush1.bf16.xpose.msra.mxu0 0
      %924 = vmatprep.subr.bf16.mxu0 0
      %925 = vmatpush1.bf16.xpose.msra.mxu0 0
      %926 = vmatprep.subr.bf16.mxu0 0
      %927 = vmatpush1.bf16.xpose.msra.mxu0 0
      %928 = vmatprep.mubr.bf16.mxu0 0
      %929 = vmatmul.mubr.bf16.gmra.mrb[0].mxu0 %v891
      %v930 = vpop.f32.mrb[0].mxu0
      %v931 = vadd.f32 0.0, %v930
      %v932 = vpop.f32.mrb[0].mxu0
      %v933 = vpop.f32.mrb[0].mxu0
      %v934 = vpop.f32.mrb[0].mxu0
      %935 = vdwg.mxu0
      %v937 = vsel %vm889, %v535, 0
      %v940 = vsel %vm889, %v712, 0
      %942 = vmatprep.subr.bf16.mxu0 0
      %943 = vmatpush1.bf16.xpose.msra.mxu0 %v940
      %944 = vmatprep.subr.bf16.mxu0 0
      %945 = vmatpush1.bf16.xpose.msra.mxu0 0
      %946 = vmatprep.subr.bf16.mxu0 0
      %947 = vmatpush1.bf16.xpose.msra.mxu0 0
      %948 = vmatprep.subr.bf16.mxu0 0
      %949 = vmatpush1.bf16.xpose.msra.mxu0 0
      %950 = vmatprep.subr.bf16.mxu0 0
      %951 = vmatpush1.bf16.xpose.msra.mxu0 0
      %952 = vmatprep.subr.bf16.mxu0 0
      %953 = vmatpush1.bf16.xpose.msra.mxu0 0
      %954 = vmatprep.subr.bf16.mxu0 0
      %955 = vmatpush1.bf16.xpose.msra.mxu0 0
      %956 = vmatprep.subr.bf16.mxu0 0
      %957 = vmatpush1.bf16.xpose.msra.mxu0 0
      %958 = vmatprep.subr.bf16.mxu0 0
      %959 = vmatpush1.bf16.xpose.msra.mxu0 0
      %960 = vmatprep.subr.bf16.mxu0 0
      %961 = vmatpush1.bf16.xpose.msra.mxu0 0
      %962 = vmatprep.subr.bf16.mxu0 0
      %963 = vmatpush1.bf16.xpose.msra.mxu0 0
      %964 = vmatprep.subr.bf16.mxu0 0
      %965 = vmatpush1.bf16.xpose.msra.mxu0 0
      %966 = vmatprep.subr.bf16.mxu0 0
      %967 = vmatpush1.bf16.xpose.msra.mxu0 0
      %968 = vmatprep.subr.bf16.mxu0 0
      %969 = vmatpush1.bf16.xpose.msra.mxu0 0
      %970 = vmatprep.subr.bf16.mxu0 0
      %971 = vmatpush1.bf16.xpose.msra.mxu0 0
      %972 = vmatprep.subr.bf16.mxu0 0
      %973 = vmatpush1.bf16.xpose.msra.mxu0 0
      %974 = vmatprep.mubr.bf16.mxu0 0
      %975 = vmatmul.mubr.bf16.gmra.mrb[0].mxu0 %v937
      %v976 = vpop.f32.mrb[0].mxu0
      %v977 = vadd.f32 0.0, %v976
      %v978 = vpop.f32.mrb[0].mxu0
      %v979 = vpop.f32.mrb[0].mxu0
      %v980 = vpop.f32.mrb[0].mxu0
      %981 = vdwg.mxu0
      %v983 = vsel %vm889, %v538, 0
      %v986 = vsel %vm889, %v715, 0
      %988 = vmatprep.subr.bf16.mxu0 0
      %989 = vmatpush1.bf16.xpose.msra.mxu0 %v986
      %990 = vmatprep.subr.bf16.mxu0 0
      %991 = vmatpush1.bf16.xpose.msra.mxu0 0
      %992 = vmatprep.subr.bf16.mxu0 0
      %993 = vmatpush1.bf16.xpose.msra.mxu0 0
      %994 = vmatprep.subr.bf16.mxu0 0
      %995 = vmatpush1.bf16.xpose.msra.mxu0 0
      %996 = vmatprep.subr.bf16.mxu0 0
      %997 = vmatpush1.bf16.xpose.msra.mxu0 0
      %998 = vmatprep.subr.bf16.mxu0 0
      %999 = vmatpush1.bf16.xpose.msra.mxu0 0
      %1000 = vmatprep.subr.bf16.mxu0 0
      %1001 = vmatpush1.bf16.xpose.msra.mxu0 0
      %1002 = vmatprep.subr.bf16.mxu0 0
      %1003 = vmatpush1.bf16.xpose.msra.mxu0 0
      %1004 = vmatprep.subr.bf16.mxu0 0
      %1005 = vmatpush1.bf16.xpose.msra.mxu0 0
      %1006 = vmatprep.subr.bf16.mxu0 0
      %1007 = vmatpush1.bf16.xpose.msra.mxu0 0
      %1008 = vmatprep.subr.bf16.mxu0 0
      %1009 = vmatpush1.bf16.xpose.msra.mxu0 0
      %1010 = vmatprep.subr.bf16.mxu0 0
      %1011 = vmatpush1.bf16.xpose.msra.mxu0 0
      %1012 = vmatprep.subr.bf16.mxu0 0
      %1013 = vmatpush1.bf16.xpose.msra.mxu0 0
      %1014 = vmatprep.subr.bf16.mxu0 0
      %1015 = vmatpush1.bf16.xpose.msra.mxu0 0
      %1016 = vmatprep.subr.bf16.mxu0 0
      %1017 = vmatpush1.bf16.xpose.msra.mxu0 0
      %1018 = vmatprep.subr.bf16.mxu0 0
      %1019 = vmatpush1.bf16.xpose.msra.mxu0 0
      %1020 = vmatprep.mubr.bf16.mxu0 0
      %1021 = vmatmul.mubr.bf16.gmra.mrb[0].mxu0 %v983
      %v1022 = vpop.f32.mrb[0].mxu0
      %v1023 = vadd.f32 0.0, %v1022
      %v1024 = vpop.f32.mrb[0].mxu0
      %v1025 = vpop.f32.mrb[0].mxu0
      %v1026 = vpop.f32.mrb[0].mxu0
      %1027 = vdwg.mxu0
      %v1029 = vsel %vm889, %v541, 0
      %v1032 = vsel %vm889, %v718, 0
      %1034 = vmatprep.subr.bf16.mxu0 0
      %1035 = vmatpush1.bf16.xpose.msra.mxu0 %v1032
      %1036 = vmatprep.subr.bf16.mxu0 0
      %1037 = vmatpush1.bf16.xpose.msra.mxu0 0
      %1038 = vmatprep.subr.bf16.mxu0 0
      %1039 = vmatpush1.bf16.xpose.msra.mxu0 0
      %1040 = vmatprep.subr.bf16.mxu0 0
      %1041 = vmatpush1.bf16.xpose.msra.mxu0 0
      %1042 = vmatprep.subr.bf16.mxu0 0
      %1043 = vmatpush1.bf16.xpose.msra.mxu0 0
      %1044 = vmatprep.subr.bf16.mxu0 0
      %1045 = vmatpush1.bf16.xpose.msra.mxu0 0
      %1046 = vmatprep.subr.bf16.mxu0 0
      %1047 = vmatpush1.bf16.xpose.msra.mxu0 0
      %1048 = vmatprep.subr.bf16.mxu0 0
      %1049 = vmatpush1.bf16.xpose.msra.mxu0 0
      %1050 = vmatprep.subr.bf16.mxu0 0
      %1051 = vmatpush1.bf16.xpose.msra.mxu0 0
      %1052 = vmatprep.subr.bf16.mxu0 0
      %1053 = vmatpush1.bf16.xpose.msra.mxu0 0
      %1054 = vmatprep.subr.bf16.mxu0 0
      %1055 = vmatpush1.bf16.xpose.msra.mxu0 0
      %1056 = vmatprep.subr.bf16.mxu0 0
      %1057 = vmatpush1.bf16.xpose.msra.mxu0 0
      %1058 = vmatprep.subr.bf16.mxu0 0
      %1059 = vmatpush1.bf16.xpose.msra.mxu0 0
      %1060 = vmatprep.subr.bf16.mxu0 0
      %1061 = vmatpush1.bf16.xpose.msra.mxu0 0
      %1062 = vmatprep.subr.bf16.mxu0 0
      %1063 = vmatpush1.bf16.xpose.msra.mxu0 0
      %1064 = vmatprep.subr.bf16.mxu0 0
      %1065 = vmatpush1.bf16.xpose.msra.mxu0 0
      %1066 = vmatprep.mubr.bf16.mxu0 0
      %1067 = vmatmul.mubr.bf16.gmra.mrb[0].mxu0 %v1029
      %v1068 = vpop.f32.mrb[0].mxu0
      %v1069 = vadd.f32 0.0, %v1068
      %v1070 = vpop.f32.mrb[0].mxu0
      %v1071 = vpop.f32.mrb[0].mxu0
      %v1072 = vpop.f32.mrb[0].mxu0
      %1073 = vdwg.mxu0
      %v1074 = vsel %vm889, %v931, -inf
      %1075 = vmax.xlane.f32.xlu0 %v1074
      %v1076 = vpop.xlane.xlu0 %1075
      %v1077 = vsel %vm889, %v977, -inf
      %1078 = vmax.xlane.f32.xlu0 %v1077
      %v1079 = vpop.xlane.xlu0 %1078
      %v1080 = vsel %vm889, %v1023, -inf
      %1081 = vmax.xlane.f32.xlu0 %v1080
      %v1082 = vpop.xlane.xlu0 %1081
      %v1083 = vsel %vm889, %v1069, -inf
      %1084 = vmax.xlane.f32.xlu0 %v1083
      %v1085 = vpop.xlane.xlu0 %1084
      %v1086 = vsub.f32 %v931, %v1076
      %v1087 = vsub.f32 %v977, %v1079
      %v1088 = vsub.f32 %v1023, %v1082
      %v1089 = vsub.f32 %v1069, %v1085
      %v1090 = vmul.f32 %v1086, 1.442695
      %v1091 = vpow.pop %v1090
      %v1092 = vmul.f32 %v1087, 1.442695
      %v1093 = vpow.pop %v1092
      %v1094 = vmul.f32 %v1088, 1.442695
      %v1095 = vpow.pop %v1094
      %v1096 = vmul.f32 %v1089, 1.442695
      %v1097 = vpow.pop %v1096
      %v1098 = vsel %vm889, %v1091, 0.0
      %1099 = vadd.xlane.f32.xlu0 %v1098
      %v1100 = vpop.xlane.xlu0 %1099
      %v1101 = vsel %vm889, %v1093, 0.0
      %1102 = vadd.xlane.f32.xlu0 %v1101
      %v1103 = vpop.xlane.xlu0 %1102
      %v1104 = vsel %vm889, %v1095, 0.0
      %1105 = vadd.xlane.f32.xlu0 %v1104
      %v1106 = vpop.xlane.xlu0 %1105
      %v1107 = vsel %vm889, %v1097, 0.0
      %1108 = vadd.xlane.f32.xlu0 %v1107
      %v1109 = vpop.xlane.xlu0 %1108
      %v1110 = vrcp.pop %v1100
      %v1111 = vrcp.pop %v1103
      %v1112 = vrcp.pop %v1106
      %v1113 = vrcp.pop %v1109
      %v1114 = vmul.f32 %v1091, %v1110
      %v1115 = vmul.f32 %v1093, %v1111
      %v1116 = vmul.f32 %v1095, %v1112
      %v1117 = vmul.f32 %v1097, %v1113
      %v1118 = vpack.c.bf16 %v1114, %v1114
      %v1119 = vpack.c.bf16 %v1115, %v1115
      %v1120 = vpack.c.bf16 %v1116, %v1116
      %v1121 = vpack.c.bf16 %v1117, %v1117
      %v1123 = vsel %vm889, %v1118, 0
      %vm1125 = vcmask 1043456
      %v1127 = vsel %vm1125, %v879, 0
      %1129 = vmatprep.subr.bf16.mxu0 0
      %1130 = vmatpush1.bf16.msra.mxu0 %v1127
      %1131 = vmatprep.subr.bf16.mxu0 0
      %1132 = vmatpush1.bf16.msra.mxu0 0
      %1133 = vmatprep.subr.bf16.mxu0 0
      %1134 = vmatpush1.bf16.msra.mxu0 0
      %1135 = vmatprep.subr.bf16.mxu0 0
      %1136 = vmatpush1.bf16.msra.mxu0 0
      %1137 = vmatprep.subr.bf16.mxu0 0
      %1138 = vmatpush1.bf16.msra.mxu0 0
      %1139 = vmatprep.subr.bf16.mxu0 0
      %1140 = vmatpush1.bf16.msra.mxu0 0
      %1141 = vmatprep.subr.bf16.mxu0 0
      %1142 = vmatpush1.bf16.msra.mxu0 0
      %1143 = vmatprep.subr.bf16.mxu0 0
      %1144 = vmatpush1.bf16.msra.mxu0 0
      %1145 = vmatprep.subr.bf16.mxu0 0
      %1146 = vmatpush1.bf16.msra.mxu0 0
      %1147 = vmatprep.subr.bf16.mxu0 0
      %1148 = vmatpush1.bf16.msra.mxu0 0
      %1149 = vmatprep.subr.bf16.mxu0 0
      %1150 = vmatpush1.bf16.msra.mxu0 0
      %1151 = vmatprep.subr.bf16.mxu0 0
      %1152 = vmatpush1.bf16.msra.mxu0 0
      %1153 = vmatprep.subr.bf16.mxu0 0
      %1154 = vmatpush1.bf16.msra.mxu0 0
      %1155 = vmatprep.subr.bf16.mxu0 0
      %1156 = vmatpush1.bf16.msra.mxu0 0
      %1157 = vmatprep.subr.bf16.mxu0 0
      %1158 = vmatpush1.bf16.msra.mxu0 0
      %1159 = vmatprep.subr.bf16.mxu0 0
      %1160 = vmatpush1.bf16.msra.mxu0 0
      %1161 = vmatprep.mubr.bf16.mxu0 0
      %1162 = vmatmul.mubr.bf16.gmra.mrb[0].mxu0 %v1123
      %v1163 = vpop.f32.mrb[0].mxu0
      %v1164 = vadd.f32 0.0, %v1163
      %v1165 = vpop.f32.mrb[0].mxu0
      %v1166 = vpop.f32.mrb[0].mxu0
      %v1167 = vpop.f32.mrb[0].mxu0
      %1168 = vdwg.mxu0
      %v1170 = vsel %vm889, %v1119, 0
      %v1173 = vsel %vm1125, %v882, 0
      %1175 = vmatprep.subr.bf16.mxu0 0
      %1176 = vmatpush1.bf16.msra.mxu0 %v1173
      %1177 = vmatprep.subr.bf16.mxu0 0
      %1178 = vmatpush1.bf16.msra.mxu0 0
      %1179 = vmatprep.subr.bf16.mxu0 0
      %1180 = vmatpush1.bf16.msra.mxu0 0
      %1181 = vmatprep.subr.bf16.mxu0 0
      %1182 = vmatpush1.bf16.msra.mxu0 0
      %1183 = vmatprep.subr.bf16.mxu0 0
      %1184 = vmatpush1.bf16.msra.mxu0 0
      %1185 = vmatprep.subr.bf16.mxu0 0
      %1186 = vmatpush1.bf16.msra.mxu0 0
      %1187 = vmatprep.subr.bf16.mxu0 0
      %1188 = vmatpush1.bf16.msra.mxu0 0
      %1189 = vmatprep.subr.bf16.mxu0 0
      %1190 = vmatpush1.bf16.msra.mxu0 0
      %1191 = vmatprep.subr.bf16.mxu0 0
      %1192 = vmatpush1.bf16.msra.mxu0 0
      %1193 = vmatprep.subr.bf16.mxu0 0
      %1194 = vmatpush1.bf16.msra.mxu0 0
      %1195 = vmatprep.subr.bf16.mxu0 0
      %1196 = vmatpush1.bf16.msra.mxu0 0
      %1197 = vmatprep.subr.bf16.mxu0 0
      %1198 = vmatpush1.bf16.msra.mxu0 0
      %1199 = vmatprep.subr.bf16.mxu0 0
      %1200 = vmatpush1.bf16.msra.mxu0 0
      %1201 = vmatprep.subr.bf16.mxu0 0
      %1202 = vmatpush1.bf16.msra.mxu0 0
      %1203 = vmatprep.subr.bf16.mxu0 0
      %1204 = vmatpush1.bf16.msra.mxu0 0
      %1205 = vmatprep.subr.bf16.mxu0 0
      %1206 = vmatpush1.bf16.msra.mxu0 0
      %1207 = vmatprep.mubr.bf16.mxu0 0
      %1208 = vmatmul.mubr.bf16.gmra.mrb[0].mxu0 %v1170
      %v1209 = vpop.f32.mrb[0].mxu0
      %v1210 = vadd.f32 0.0, %v1209
      %v1211 = vpop.f32.mrb[0].mxu0
      %v1212 = vpop.f32.mrb[0].mxu0
      %v1213 = vpop.f32.mrb[0].mxu0
      %1214 = vdwg.mxu0
      %v1216 = vsel %vm889, %v1120, 0
      %v1219 = vsel %vm1125, %v885, 0
      %1221 = vmatprep.subr.bf16.mxu0 0
      %1222 = vmatpush1.bf16.msra.mxu0 %v1219
      %1223 = vmatprep.subr.bf16.mxu0 0
      %1224 = vmatpush1.bf16.msra.mxu0 0
      %1225 = vmatprep.subr.bf16.mxu0 0
      %1226 = vmatpush1.bf16.msra.mxu0 0
      %1227 = vmatprep.subr.bf16.mxu0 0
      %1228 = vmatpush1.bf16.msra.mxu0 0
      %1229 = vmatprep.subr.bf16.mxu0 0
      %1230 = vmatpush1.bf16.msra.mxu0 0
      %1231 = vmatprep.subr.bf16.mxu0 0
      %1232 = vmatpush1.bf16.msra.mxu0 0
      %1233 = vmatprep.subr.bf16.mxu0 0
      %1234 = vmatpush1.bf16.msra.mxu0 0
      %1235 = vmatprep.subr.bf16.mxu0 0
      %1236 = vmatpush1.bf16.msra.mxu0 0
      %1237 = vmatprep.subr.bf16.mxu0 0
      %1238 = vmatpush1.bf16.msra.mxu0 0
      %1239 = vmatprep.subr.bf16.mxu0 0
      %1240 = vmatpush1.bf16.msra.mxu0 0
      %1241 = vmatprep.subr.bf16.mxu0 0
      %1242 = vmatpush1.bf16.msra.mxu0 0
      %1243 = vmatprep.subr.bf16.mxu0 0
      %1244 = vmatpush1.bf16.msra.mxu0 0
      %1245 = vmatprep.subr.bf16.mxu0 0
      %1246 = vmatpush1.bf16.msra.mxu0 0
      %1247 = vmatprep.subr.bf16.mxu0 0
      %1248 = vmatpush1.bf16.msra.mxu0 0
      %1249 = vmatprep.subr.bf16.mxu0 0
      %1250 = vmatpush1.bf16.msra.mxu0 0
      %1251 = vmatprep.subr.bf16.mxu0 0
      %1252 = vmatpush1.bf16.msra.mxu0 0
      %1253 = vmatprep.mubr.bf16.mxu0 0
      %1254 = vmatmul.mubr.bf16.gmra.mrb[0].mxu0 %v1216
      %v1255 = vpop.f32.mrb[0].mxu0
      %v1256 = vadd.f32 0.0, %v1255
      %v1257 = vpop.f32.mrb[0].mxu0
      %v1258 = vpop.f32.mrb[0].mxu0
      %v1259 = vpop.f32.mrb[0].mxu0
      %1260 = vdwg.mxu0
      %v1262 = vsel %vm889, %v1121, 0
      %v1265 = vsel %vm1125, %v888, 0
      %1267 = vmatprep.subr.bf16.mxu0 0
      %1268 = vmatpush1.bf16.msra.mxu0 %v1265
      %1269 = vmatprep.subr.bf16.mxu0 0
      %1270 = vmatpush1.bf16.msra.mxu0 0
      %1271 = vmatprep.subr.bf16.mxu0 0
      %1272 = vmatpush1.bf16.msra.mxu0 0
      %1273 = vmatprep.subr.bf16.mxu0 0
      %1274 = vmatpush1.bf16.msra.mxu0 0
      %1275 = vmatprep.subr.bf16.mxu0 0
      %1276 = vmatpush1.bf16.msra.mxu0 0
      %1277 = vmatprep.subr.bf16.mxu0 0
      %1278 = vmatpush1.bf16.msra.mxu0 0
      %1279 = vmatprep.subr.bf16.mxu0 0
      %1280 = vmatpush1.bf16.msra.mxu0 0
      %1281 = vmatprep.subr.bf16.mxu0 0
      %1282 = vmatpush1.bf16.msra.mxu0 0
      %1283 = vmatprep.subr.bf16.mxu0 0
      %1284 = vmatpush1.bf16.msra.mxu0 0
      %1285 = vmatprep.subr.bf16.mxu0 0
      %1286 = vmatpush1.bf16.msra.mxu0 0
      %1287 = vmatprep.subr.bf16.mxu0 0
      %1288 = vmatpush1.bf16.msra.mxu0 0
      %1289 = vmatprep.subr.bf16.mxu0 0
      %1290 = vmatpush1.bf16.msra.mxu0 0
      %1291 = vmatprep.subr.bf16.mxu0 0
      %1292 = vmatpush1.bf16.msra.mxu0 0
      %1293 = vmatprep.subr.bf16.mxu0 0
      %1294 = vmatpush1.bf16.msra.mxu0 0
      %1295 = vmatprep.subr.bf16.mxu0 0
      %1296 = vmatpush1.bf16.msra.mxu0 0
      %1297 = vmatprep.subr.bf16.mxu0 0
      %1298 = vmatpush1.bf16.msra.mxu0 0
      %1299 = vmatprep.mubr.bf16.mxu0 0
      %1300 = vmatmul.mubr.bf16.gmra.mrb[0].mxu0 %v1262
      %v1301 = vpop.f32.mrb[0].mxu0
      %v1302 = vadd.f32 0.0, %v1301
      %v1303 = vpop.f32.mrb[0].mxu0
      %v1304 = vpop.f32.mrb[0].mxu0
      %v1305 = vpop.f32.mrb[0].mxu0
      %1306 = vdwg.mxu0
      %v1307 = vpack.c.bf16 %v1164, %v1164
      %v1309 = vunpack.c.l.s4 1983009808
      %v1310 = vunpack.c.0.s8 %v1309
      %v1311 = vlaneseq
      %v1312 = vshrl.u32 %v1311, 7
      %v1313 = vsub.s32 %v1310, %v1312
      %v1314 = vrot.slane %v1307, %v1313
      %v1315 = vpack.c.bf16 %v1256, %v1256
      %v1317 = vunpack.c.l.s4 1983009808
      %v1318 = vunpack.c.0.s8 %v1317
      %v1319 = vlaneseq
      %v1320 = vshrl.u32 %v1319, 7
      %v1321 = vsub.s32 %v1318, %v1320
      %v1322 = vrot.slane %v1315, %v1321
      %v1323 = vcombine.low %v1314, %v1322
      %v1324 = vcombine.high %v1314, %v1322
      %v1326 = vunpack.c.l.s4 1934713408
      %v1327 = vunpack.c.0.s8 %v1326
      %v1328 = vlaneseq
      %v1329 = vshrl.u32 %v1328, 7
      %v1330 = vsub.s32 %v1327, %v1329
      %v1331 = vrot.slane %v1323, %v1330
      %v1333 = vunpack.c.l.s4 1934713408
      %v1334 = vunpack.c.0.s8 %v1333
      %v1335 = vlaneseq
      %v1336 = vshrl.u32 %v1335, 7
      %v1337 = vsub.s32 %v1334, %v1336
      %v1338 = vrot.slane %v1324, %v1337
      %v1339 = vcombine.high %v1331, 0
      %v1340 = vcombine.high %v1338, 0
      %v1341 = vpack.c.bf16 %v1210, %v1210
      %v1343 = vunpack.c.l.s4 1983009808
      %v1344 = vunpack.c.0.s8 %v1343
      %v1345 = vlaneseq
      %v1346 = vshrl.u32 %v1345, 7
      %v1347 = vsub.s32 %v1344, %v1346
      %v1348 = vrot.slane %v1341, %v1347
      %v1349 = vpack.c.bf16 %v1302, %v1302
      %v1351 = vunpack.c.l.s4 1983009808
      %v1352 = vunpack.c.0.s8 %v1351
      %v1353 = vlaneseq
      %v1354 = vshrl.u32 %v1353, 7
      %v1355 = vsub.s32 %v1352, %v1354
      %v1356 = vrot.slane %v1349, %v1355
      %v1357 = vcombine.low %v1348, %v1356
      %v1358 = vcombine.high %v1348, %v1356
      %v1360 = vunpack.c.l.s4 1934713408
      %v1361 = vunpack.c.0.s8 %v1360
      %v1362 = vlaneseq
      %v1363 = vshrl.u32 %v1362, 7
      %v1364 = vsub.s32 %v1361, %v1363
      %v1365 = vrot.slane %v1357, %v1364
      %v1367 = vunpack.c.l.s4 1934713408
      %v1368 = vunpack.c.0.s8 %v1367
      %v1369 = vlaneseq
      %v1370 = vshrl.u32 %v1369, 7
      %v1371 = vsub.s32 %v1368, %v1370
      %v1372 = vrot.slane %v1358, %v1371
      %v1373 = vcombine.high %v1365, 0
      %v1374 = vcombine.high %v1372, 0
      %v1377 = vpack.i.b16 %v1365, %v1331
      %v1379 = vshrl.u32 %v1331, 16
      %v1380 = vshrl.u32 %v1365, 16
      %v1381 = vpack.i.b16 %v1380, %v1379
      %v1385 = vpack.i.b16 %v1373, %v1339
      %v1387 = vshrl.u32 %v1339, 16
      %v1388 = vshrl.u32 %v1373, 16
      %v1389 = vpack.i.b16 %v1388, %v1387
      %v1393 = vpack.i.b16 %v1372, %v1338
      %v1395 = vshrl.u32 %v1338, 16
      %v1396 = vshrl.u32 %v1372, 16
      %v1397 = vpack.i.b16 %v1396, %v1395
      %v1401 = vpack.i.b16 %v1374, %v1340
      %v1403 = vshrl.u32 %v1340, 16
      %v1404 = vshrl.u32 %v1374, 16
      %v1405 = vpack.i.b16 %v1404, %v1403
      %v1407 = vcombine.low %v1377, %v1393
      %v1409 = vunpack.c.l.s4 1983009808
      %v1410 = vunpack.c.0.s8 %v1409
      %v1411 = vlaneseq
      %v1412 = vshrl.u32 %v1411, 7
      %v1413 = vsub.s32 %v1410, %v1412
      %v1414 = vrot.slane %v1407, %v1413
      %v1415 = vcombine.low %v1385, %v1401
      %v1417 = vunpack.c.l.s4 1983009808
      %v1418 = vunpack.c.0.s8 %v1417
      %v1419 = vlaneseq
      %v1420 = vshrl.u32 %v1419, 7
      %v1421 = vsub.s32 %v1418, %v1420
      %v1422 = vrot.slane %v1415, %v1421
      %v1423 = vcombine.low %v1414, %v1422
      %v1425 = vunpack.c.l.s4 1934713408
      %v1426 = vunpack.c.0.s8 %v1425
      %v1427 = vlaneseq
      %v1428 = vshrl.u32 %v1427, 7
      %v1429 = vsub.s32 %v1426, %v1428
      %v1430 = vrot.slane %v1423, %v1429
      %v1431 = vcombine.high %v1430, 0
      %v1432 = vcombine.low %v1381, %v1397
      %v1434 = vunpack.c.l.s4 1983009808
      %v1435 = vunpack.c.0.s8 %v1434
      %v1436 = vlaneseq
      %v1437 = vshrl.u32 %v1436, 7
      %v1438 = vsub.s32 %v1435, %v1437
      %v1439 = vrot.slane %v1432, %v1438
      %v1440 = vcombine.low %v1389, %v1405
      %v1442 = vunpack.c.l.s4 1983009808
      %v1443 = vunpack.c.0.s8 %v1442
      %v1444 = vlaneseq
      %v1445 = vshrl.u32 %v1444, 7
      %v1446 = vsub.s32 %v1443, %v1445
      %v1447 = vrot.slane %v1440, %v1446
      %v1448 = vcombine.low %v1439, %v1447
      %v1450 = vunpack.c.l.s4 1934713408
      %v1451 = vunpack.c.0.s8 %v1450
      %v1452 = vlaneseq
      %v1453 = vshrl.u32 %v1452, 7
      %v1454 = vsub.s32 %v1451, %v1453
      %v1455 = vrot.slane %v1448, %v1454
      %v1456 = vcombine.high %v1455, 0
      %v1459 = vpack.i.b16 %v1455, %v1430
      %v1460 = vshrl.u32 %v1430, 16
      %v1461 = vshrl.u32 %v1455, 16
      %v1462 = vpack.i.b16 %v1461, %v1460
      %v1465 = vpack.i.b16 %v1456, %v1431
      %v1466 = vshrl.u32 %v1431, 16
      %v1467 = vshrl.u32 %v1456, 16
      %v1468 = vpack.i.b16 %v1467, %v1466
      %1469 = vrot.lane.b32.xlu0 %v1462, 8
      %v1470 = vpop.permute.xlu0 %1469
      %1471 = vrot.lane.b32.xlu0 %v1465, 16
      %v1472 = vpop.permute.xlu0 %1471
      %1473 = vrot.lane.b32.xlu0 %v1468, 24
      %v1474 = vpop.permute.xlu0 %1473
      %v1477 = vsel %vm889, %v1459, %v1470
      %vm1478 = vcmask 130048
      %v1480 = vsel %vm1478, %v1477, %v1472
      %vm1481 = vcmask 195584
      %v1483 = vsel %vm1481, %v1480, %v1474
      %vm1485 = vcmask 257024
      %1486 = vst.msk [vmem:[%s270] sm:$0xf] %vm1485, %v1483
      %p1487 = scmp.lt.s32.totalorder %s20, 1
      %s1488 = scalar_select %p1487, %s20, 1
      %p1489 = scmp.lt.s32.totalorder %s21, 0
      %s1490 = scalar_select %p1489, %s21, 0
      %s1491 = sadd.s32 %s1490, %s1488
      %s1492 = smul.addr %s1491, 4
      %s1493 = scalar_lea.vmem %s5, %s1492
      // Predicated region
      $region41: #{transformer_encoder.4} parent=39 // pred_check
        %p1494 = pneg %p168
      $region42: #{transformer_encoder.4} parent=39 // pred_check_branch
        %1496 = sbr.rel (%p1494) target = $region44
      $region43: #{transformer_encoder.4} parent=39 // pred_region
        _
      $region44: #{transformer_encoder.4} parent=39 // pred_fallthru
        _
    $region40: #{transformer_encoder.4} parent=5 // pred_fallthru
      _
    %p1497 = scmp.le.s32.totalorder 2, %s11
    // Predicated region
    $region45: #{transformer_encoder.4} parent=5 // pred_check
      %p1498 = pneg %p1497
    $region46: #{transformer_encoder.4} parent=5 // pred_check_branch
      %1500 = sbr.rel (%p1498) target = $region48
    $region47: #{transformer_encoder.4} parent=5 // pred_region
      %s1501 = ssub.s32 %s11, 2
      // Predicated region
      $region49: #{transformer_encoder.4} parent=47 // pred_check
        %p1502 = pneg %p174
      $region50: #{transformer_encoder.4} parent=47 // pred_check_branch
        %1504 = sbr.rel (%p1502) target = $region52
      $region51: #{transformer_encoder.4} parent=47 // pred_region
        %p1505 = scmp.lt.s32.totalorder %s22, 1
        %s1506 = scalar_select %p1505, %s22, 1
        %p1507 = scmp.lt.s32.totalorder %s23, 0
        %s1508 = scalar_select %p1507, %s23, 0
        %s1509 = sadd.s32 %s1508, %s1506
        %s1510 = smul.addr %s1509, 4
        %s1511 = scalar_lea.vmem %s5, %s1510
      $region52: #{transformer_encoder.4} parent=47 // pred_fallthru
        _
    $region48: #{transformer_encoder.4} parent=5 // pred_fallthru
      _
  $region6: #{transformer_encoder.4} parent=0 // loop_footer
    %s15 = sadd.s32 1, %s11
  $region7: #{transformer_encoder.4} parent=0 // loop_footer_branch
    %10 = sbr.rel target = $region3
  $region8: #{transformer_encoder.4} parent=0 // loop_exit
    _

</llo_original>
